<compile_context>
chip_gen: v7x
topology: tpu7x:2x2x1
jax: 0.10.0
libtpu: 0.0.40
codegen_flags: <defaults>
</compile_context>

<pallas_src>
import math

import jax
import jax.numpy as jnp
from jax import lax
from jax.experimental import pallas as pl
from jax.experimental.pallas import tpu as pltpu


def _round_up(a, b):
    return (a + b - 1) // b * b


def _pick_group_factor(D):
    """Points packed per kernel row. Power of two; Dg = r*D multiple of 128."""
    g = math.gcd(D, 128)
    r_base = 128 // g
    # gcd == 1 (odd D), or the minimal block-diagonal weight would already be
    # huge: fall back to ungrouped VPU path.
    if r_base > 64 or 12 * r_base * r_base * D > (4 << 20):
        return 1
    r = r_base
    # Raise r (powers of two only) while the input row stays within one
    # 128-lane group and the block-diagonal weight stays under ~2 MiB.
    while 3 * (2 * r) <= 128 and 12 * (2 * r) ** 2 * D <= (2 << 20):
        r *= 2
    return r


def _make_kernel(use_mxu):
    def kernel(x_ref, w_ref, b_ref, o_ref):
        # x_ref: (tg, Kg)  w_ref: (Kg, Dg)  b_ref: (1, Dg)  o_ref: (tg, Dg)
        x = x_ref[...].astype(jnp.float32)
        if use_mxu:
            # Block-diagonal grouped matmul -> one lane-dense (tg, Dg) tile.
            # MXU has huge slack in this mem-bound kernel, so HIGHEST is free.
            y = jnp.dot(x, w_ref[...],
                        preferred_element_type=jnp.float32,
                        precision=lax.Precision.HIGHEST)
        else:
            # K=3 contraction as 3 VPU broadcast-FMAs (exact f32, no MXU
            # lane-padding relayout).  Used only for odd D.
            w = w_ref[...]
            y = (x[:, 0:1] * w[0:1, :]
                 + x[:, 1:2] * w[1:2, :]
                 + x[:, 2:3] * w[2:3, :])
        o_ref[...] = (y + b_ref[...]).astype(o_ref.dtype)
    return kernel


def positional_encoding(x, weight, bias, *, out_dtype=None, step_bytes=12 << 20):
    """
    x:      (B, N, 3)      float32 (or bf16)
    weight: (in_dim, 3)    float32   (PyTorch nn.Linear layout)
    bias:   (in_dim,)      float32
    out_dtype: output dtype (defaults to x.dtype; bf16 halves HBM writeback
               when the consumer tolerates it).
    step_bytes: target bytes of (input + output) data per grid step.
    returns (B, N, in_dim)
    """
    B, N, K = x.shape
    assert K == 3
    D = weight.shape[0]
    out_dtype = jnp.dtype(out_dtype or x.dtype)
    out_itemsize = out_dtype.itemsize
    M = B * N

    r = _pick_group_factor(D)
    Kg, Dg = 3 * r, D * r

    # Pad the point count only to a multiple of 8*r (<= 8r-1 rows) so the
    # grouped row count G is sublane-aligned; no rounding up to grid*tile.
    M_pad = _round_up(M, 8 * r)
    G = M_pad // r

    # --- VMEM-aware tile sizing (corrected for 128-lane input padding) -----
    in_row = _round_up(Kg, 128) * 4                 # input bytes / grouped row
    out_row = _round_up(Dg, 128) * out_itemsize     # output bytes / grouped row
    tg = max(8, (step_bytes // (in_row + out_row)) // 8 * 8)
    tg = min(tg, G)
    # Keep >= 2 grid steps when there is enough work so ("parallel",) can
    # shard across v7x's two TensorCores.
    if G > 8:
        tg = min(tg, max(8, _round_up(pl.cdiv(G, 2), 8)))
    grid = pl.cdiv(G, tg)

    # --- operand prep (row-major regroup is a free view) -------------------
    x2 = x.reshape(M, 3)
    if M_pad != M:
        x2 = jnp.pad(x2, ((0, M_pad - M), (0, 0)))
    xg = x2.reshape(G, Kg)

    wt = weight.astype(jnp.float32).T                         # (3, D)
    if r == 1:
        wg = wt
    else:
        wg = jnp.kron(jnp.eye(r, dtype=jnp.float32), wt)      # (3r, rD) block-diag
    bg = jnp.tile(bias.astype(jnp.float32), r).reshape(1, Dg)

    # Explicit scoped-VMEM budget: double-buffered in/out blocks + weight/bias
    # (v5e default is only 16 MiB; v7x physical is 64 MiB, so cap at 48 MiB).
    est = (2 * tg * (in_row + out_row)
           + 2 * _round_up(Kg, 8) * _round_up(Dg, 128) * 4
           + 2 * 8 * _round_up(Dg, 128) * 4)
    vmem_limit = int(min(max(est * 5 // 4 + (2 << 20), 16 << 20), 48 << 20))

    cost = pl.CostEstimate(
        flops=2 * M * 3 * D,
        transcendentals=0,
        bytes_accessed=(M * 3 + 3 * D + D) * 4 + M * D * out_itemsize,
    )

    out2 = pl.pallas_call(
        _make_kernel(use_mxu=(r > 1)),
        out_shape=jax.ShapeDtypeStruct((G, Dg), out_dtype),
        grid=(grid,),
        in_specs=[
            pl.BlockSpec((tg, Kg), lambda i: (i, 0)),   # packed point tile
            pl.BlockSpec((Kg, Dg), lambda i: (0, 0)),   # (grouped) weight
            pl.BlockSpec((1, Dg), lambda i: (0, 0)),    # (grouped) bias
        ],
        out_specs=pl.BlockSpec((tg, Dg), lambda i: (i, 0)),
        compiler_params=pltpu.CompilerParams(
            dimension_semantics=("parallel",),
            vmem_limit_bytes=vmem_limit,
        ),
        cost_estimate=cost,
    )(xg, wg, bg)

    # (G, r*D) row-major == (M_pad, D) row-major; slice only if we padded.
    y = out2.reshape(M_pad, D)
    if M_pad != M:
        y = y[:M]
    return y.reshape(B, N, D)


if __name__ == "__main__":
    B, N, in_dim = 2, 16, 32

    key = jax.random.PRNGKey(0)
    kx, kw, kb = jax.random.split(key, 3)

    x = jax.random.normal(kx, (B, N, 3), dtype=jnp.float32)
    bound = 1.0 / jnp.sqrt(3.0)
    weight = jax.random.uniform(kw, (in_dim, 3), minval=-bound, maxval=bound,
                                dtype=jnp.float32)
    bias = jax.random.uniform(kb, (in_dim,), minval=-bound, maxval=bound,
                              dtype=jnp.float32)

    def ref(x, weight, bias):
        wt = weight.T
        return (x[..., 0:1] * wt[0] + x[..., 1:2] * wt[1]
                + x[..., 2:3] * wt[2] + bias)

    # Small case (single grid step, grouped MXU path).
    y = positional_encoding(x, weight, bias)
    jax.block_until_ready(y)
    assert y.shape == (B, N, in_dim)
    assert jnp.allclose(y, ref(x, weight, bias), atol=1e-4, rtol=1e-4)

    # Larger case: multiple grid steps, no padding / no output slice.
    x_big = jax.random.normal(kb, (4, 2048, 3), dtype=jnp.float32)
    y_big = positional_encoding(x_big, weight, bias)
    jax.block_until_ready(y_big)
    assert jnp.allclose(y_big, ref(x_big, weight, bias), atol=1e-4, rtol=1e-4)

    # Ragged point count exercises the (tiny) pad + slice path.
    x_rag = jax.random.normal(kw, (3, 13, 3), dtype=jnp.float32)
    y_rag = positional_encoding(x_rag, weight, bias)
    jax.block_until_ready(y_rag)
    assert y_rag.shape == (3, 13, in_dim)
    assert jnp.allclose(y_rag, ref(x_rag, weight, bias), atol=1e-4, rtol=1e-4)

    # Odd in_dim -> r == 1 VPU-FMA fallback path.
    in_dim_odd = 17
    w_odd = jax.random.uniform(kw, (in_dim_odd, 3), minval=-bound, maxval=bound,
                               dtype=jnp.float32)
    b_odd = jax.random.uniform(kb, (in_dim_odd,), minval=-bound, maxval=bound,
                               dtype=jnp.float32)
    y_odd = positional_encoding(x, w_odd, b_odd)
    jax.block_until_ready(y_odd)
    assert jnp.allclose(y_odd, ref(x, w_odd, b_odd), atol=1e-4, rtol=1e-4)

    print("KERNEL_OK")
</pallas_src>

<mosaic_0001>
module attributes {stable_mosaic.version = 11 : i64} {
  func.func @kernel(%arg0: i32, %arg1: memref<8x96xf32, #tpu.memory_space<vmem>>, %arg2: memref<96x1024xf32, #tpu.memory_space<vmem>>, %arg3: memref<1x1024xf32, #tpu.memory_space<vmem>>, %arg4: memref<8x1024xf32, #tpu.memory_space<vmem>>) attributes {dimension_semantics = [#tpu.dimension_semantics<parallel>], iteration_bounds = array<i64: 1>, scalar_prefetch = 0 : i64, scratch_operands = 0 : i64, tpu.core_type = #tpu.core_type<tc>, window_params = [{transform_indices = @transform_0, window_bounds = array<i64: 8, 96>}, {pipeline_mode = #tpu.pipeline_mode<synchronous>, transform_indices = @transform_1, window_bounds = array<i64: 96, 1024>}, {pipeline_mode = #tpu.pipeline_mode<synchronous>, transform_indices = @transform_2, window_bounds = array<i64: 1, 1024>}, {transform_indices = @transform_3, window_bounds = array<i64: 8, 1024>}]} {
    %c0 = arith.constant 0 : index
    %c0_0 = arith.constant 0 : index
    %0 = vector.load %arg1[%c0, %c0_0] : memref<8x96xf32, #tpu.memory_space<vmem>>, vector<8x96xf32>
    %c0_1 = arith.constant 0 : index
    %c0_2 = arith.constant 0 : index
    %1 = vector.load %arg2[%c0_1, %c0_2] : memref<96x1024xf32, #tpu.memory_space<vmem>>, vector<96x1024xf32>
    %cst = arith.constant dense<0.000000e+00> : vector<8x1024xf32>
    %2 = tpu.matmul %0, %1, %cst {dimension_numbers = #tpu.dot_dimension_numbers<[1], [0], [0], [1], [0, 0, 1, 1], [], []>, precision = #tpu.contract_precision<fp32>} : vector<8x96xf32>, vector<96x1024xf32>, vector<8x1024xf32> -> vector<8x1024xf32>
    %c0_3 = arith.constant 0 : index
    %c0_4 = arith.constant 0 : index
    %3 = vector.load %arg3[%c0_3, %c0_4] : memref<1x1024xf32, #tpu.memory_space<vmem>>, vector<1x1024xf32>
    %4 = vector.broadcast %3 : vector<1x1024xf32> to vector<8x1024xf32>
    %5 = arith.addf %2, %4 : vector<8x1024xf32>
    %c0_5 = arith.constant 0 : index
    %c0_6 = arith.constant 0 : index
    %6 = vector.load %arg4[%c0_5, %c0_6] : memref<8x1024xf32, #tpu.memory_space<vmem>>, vector<8x1024xf32>
    tpu.vector_store %arg4[%c0_5, %c0_6], %5 {strides = array<i32>} : memref<8x1024xf32, #tpu.memory_space<vmem>>, vector<8x1024xf32>,
    return
  }
  func.func @transform_0(%arg0: i32) -> (i32, i32) {
    %c0_i32 = arith.constant 0 : i32
    %c0_i32_0 = arith.constant 0 : i32
    return %arg0, %c0_i32 : i32, i32
  }
  func.func @transform_1(%arg0: i32) -> (i32, i32) {
    %c0_i32 = arith.constant 0 : i32
    %c0_i32_0 = arith.constant 0 : i32
    %c0_i32_1 = arith.constant 0 : i32
    return %c0_i32, %c0_i32_0 : i32, i32
  }
  func.func @transform_2(%arg0: i32) -> (i32, i32) {
    %c0_i32 = arith.constant 0 : i32
    %c0_i32_0 = arith.constant 0 : i32
    %c0_i32_1 = arith.constant 0 : i32
    return %c0_i32, %c0_i32_0 : i32, i32
  }
  func.func @transform_3(%arg0: i32) -> (i32, i32) {
    %c0_i32 = arith.constant 0 : i32
    %c0_i32_0 = arith.constant 0 : i32
    return %arg0, %c0_i32 : i32, i32
  }
}

</mosaic_0001>

<llo_original>
// kernel: tpu_custom_call.1
$region0: #{tpu_custom_call.1}
  #allocation0 [shape = 'u32[]', space=smem, size = 0x4, offset = 0x4, fixed_abs, tag = 'smem constant byte address 0x4 - core index']
  #allocation1 [shape = 'u32[144,128]{1,0:T(1,128)}', space=vmem, size = 0x12000, scoped, tag = 'internal scratch']
  %s0 = inlined_call_operand.hbm [shape: f32[8,96], index: 0, kind: input, shape index: {}]
  %s1 = inlined_call_operand.hbm [shape: f32[96,1024], index: 1, kind: input, shape index: {}]
  %s2 = inlined_call_operand.hbm [shape: f32[1,1024], index: 2, kind: input, shape index: {}]
  %s3 = inlined_call_operand.hbm [shape: f32[8,1024], index: 3, kind: output, shape index: {}]
  %s4 = sld [smem:[#allocation0]]
  $region34: #{tpu_custom_call.1} parent=0
    _
  %s6 = ssub.s32 1, %s4
  %s7 = scalar_select 0, %s6, %s4
  $region1: #{tpu_custom_call.1} parent=0
    #allocation2 [shape = 'u8[4096]{0}', space=vmem, size = 0x1000, scoped, tag = 'input window, operand 0, single buffered']
    #allocation3 [shape = 's32[1]{0}', space=sflag, size = 0x4, scoped, tag = 'scoped memory for tpu_custom_call.1']
    #allocation4 [shape = 's32[1]{0}', space=sflag, size = 0x4, scoped, tag = 'scoped memory for tpu_custom_call.1']
    #allocation5 [shape = 'u8[393216]{0}', space=vmem, size = 0x60000, scoped, tag = 'input window, operand 1, single buffered']
    #allocation6 [shape = 's32[1]{0}', space=sflag, size = 0x4, scoped, tag = 'scoped memory for tpu_custom_call.1']
    #allocation7 [shape = 'u8[4096]{0}', space=vmem, size = 0x1000, scoped, tag = 'input window, operand 2, single buffered']
    #allocation8 [shape = 'u8[32768]{0}', space=vmem, size = 0x8000, scoped, tag = 'output window, operand 0, single buffered']
    %8 = vsyncpa [#allocation3], 0
    %9 = vsyncpa [#allocation6], 0
    %10 = vsyncpa [#allocation4], 0
    // Predicated region
    $region2: #{tpu_custom_call.1} parent=1 // pred_check
      _
    $region3: #{tpu_custom_call.1} parent=1 // pred_check_branch
      %12 = sbr.rel (0) target = $region5
    $region4: #{tpu_custom_call.1} parent=1 // pred_region
      %s14 = ssub.s32 128, 128
      %15 = vsyncadd [#allocation3], %s14
      %s17 = sshll.u32 [#allocation2], 4
      %s18 = int_to_ptr.vmem [resolvable:$true] %s17
      %20 = dma.hbm_to_vmem [thread:$0]  %s0, 128, %s18, [#allocation3]
    $region5: #{tpu_custom_call.1} parent=1 // pred_fallthru
      _
    // Predicated region
    $region6: #{tpu_custom_call.1} parent=1 // pred_check
      _
    $region7: #{tpu_custom_call.1} parent=1 // pred_check_branch
      %22 = sbr.rel (0) target = $region9
    $region8: #{tpu_custom_call.1} parent=1 // pred_region
      %s24 = ssub.s32 12288, 12288
      %25 = vsyncadd [#allocation6], %s24
      %s26 = sshll.u32 [#allocation5], 4
      %s27 = int_to_ptr.vmem [resolvable:$true] %s26
      %32 = dma.hbm_to_vmem [thread:$0]  %s1, 12288, %s27, [#allocation6], 1024, 1024, 64
    $region9: #{tpu_custom_call.1} parent=1 // pred_fallthru
      _
    // Predicated region
    $region10: #{tpu_custom_call.1} parent=1 // pred_check
      _
    $region11: #{tpu_custom_call.1} parent=1 // pred_check_branch
      %34 = sbr.rel (0) target = $region13
    $region12: #{tpu_custom_call.1} parent=1 // pred_region
      %s36 = ssub.s32 128, 128
      %37 = vsyncadd [#allocation6], %s36
      %s39 = sshll.u32 [#allocation7], 4
      %s40 = int_to_ptr.vmem [resolvable:$true] %s39
      %42 = dma.hbm_to_vmem [thread:$0]  %s2, 128, %s40, [#allocation6]
    $region13: #{tpu_custom_call.1} parent=1 // pred_fallthru
      _
    // Predicated region
    $region14: #{tpu_custom_call.1} parent=1 // pred_check
      _
    $region15: #{tpu_custom_call.1} parent=1 // pred_check_branch
      %44 = sbr.rel (0) target = $region17
    $region16: #{tpu_custom_call.1} parent=1 // pred_region
      %45 = dma.done [#allocation3], 128
    $region17: #{tpu_custom_call.1} parent=1 // pred_fallthru
      _
    // Predicated region
    $region18: #{tpu_custom_call.1} parent=1 // pred_check
      _
    $region19: #{tpu_custom_call.1} parent=1 // pred_check_branch
      %47 = sbr.rel (0) target = $region21
    $region20: #{tpu_custom_call.1} parent=1 // pred_region
      %48 = dma.done [#allocation6], 12288
    $region21: #{tpu_custom_call.1} parent=1 // pred_fallthru
      _
    // Predicated region
    $region22: #{tpu_custom_call.1} parent=1 // pred_check
      _
    $region23: #{tpu_custom_call.1} parent=1 // pred_check_branch
      %50 = sbr.rel (0) target = $region25
    $region24: #{tpu_custom_call.1} parent=1 // pred_region
      %51 = dma.done [#allocation6], 128
    $region25: #{tpu_custom_call.1} parent=1 // pred_fallthru
      _
    %v52 = vld [vmem:[#allocation2] sm:$0xff]
    %v53 = vld [vmem:[#allocation5] sm:$0xff]
    %v54 = vld [vmem:[#allocation5 + $0x8] sm:$0xff]
    %v55 = vld [vmem:[#allocation5 + $0x10] sm:$0xff]
    %v56 = vld [vmem:[#allocation5 + $0x18] sm:$0xff]
    %v57 = vld [vmem:[#allocation5 + $0x20] sm:$0xff]
    %v58 = vld [vmem:[#allocation5 + $0x28] sm:$0xff]
    %v59 = vld [vmem:[#allocation5 + $0x30] sm:$0xff]
    %v60 = vld [vmem:[#allocation5 + $0x38] sm:$0xff]
    %v61 = vld [vmem:[#allocation5 + $0x40] sm:$0xff]
    %v62 = vld [vmem:[#allocation5 + $0x48] sm:$0xff]
    %v63 = vld [vmem:[#allocation5 + $0x50] sm:$0xff]
    %v64 = vld [vmem:[#allocation5 + $0x58] sm:$0xff]
    %v65 = vld [vmem:[#allocation5 + $0x60] sm:$0xff]
    %v66 = vld [vmem:[#allocation5 + $0x68] sm:$0xff]
    %v67 = vld [vmem:[#allocation5 + $0x70] sm:$0xff]
    %v68 = vld [vmem:[#allocation5 + $0x78] sm:$0xff]
    %v69 = vld [vmem:[#allocation5 + $0x80] sm:$0xff]
    %v70 = vld [vmem:[#allocation5 + $0x88] sm:$0xff]
    %v71 = vld [vmem:[#allocation5 + $0x90] sm:$0xff]
    %v72 = vld [vmem:[#allocation5 + $0x98] sm:$0xff]
    %v73 = vld [vmem:[#allocation5 + $0xa0] sm:$0xff]
    %v74 = vld [vmem:[#allocation5 + $0xa8] sm:$0xff]
    %v75 = vld [vmem:[#allocation5 + $0xb0] sm:$0xff]
    %v76 = vld [vmem:[#allocation5 + $0xb8] sm:$0xff]
    %v77 = vld [vmem:[#allocation5 + $0xc0] sm:$0xff]
    %v78 = vld [vmem:[#allocation5 + $0xc8] sm:$0xff]
    %v79 = vld [vmem:[#allocation5 + $0xd0] sm:$0xff]
    %v80 = vld [vmem:[#allocation5 + $0xd8] sm:$0xff]
    %v81 = vld [vmem:[#allocation5 + $0xe0] sm:$0xff]
    %v82 = vld [vmem:[#allocation5 + $0xe8] sm:$0xff]
    %v83 = vld [vmem:[#allocation5 + $0xf0] sm:$0xff]
    %v84 = vld [vmem:[#allocation5 + $0xf8] sm:$0xff]
    %v85 = vld [vmem:[#allocation5 + $0x100] sm:$0xff]
    %v86 = vld [vmem:[#allocation5 + $0x108] sm:$0xff]
    %v87 = vld [vmem:[#allocation5 + $0x110] sm:$0xff]
    %v88 = vld [vmem:[#allocation5 + $0x118] sm:$0xff]
    %v89 = vld [vmem:[#allocation5 + $0x120] sm:$0xff]
    %v90 = vld [vmem:[#allocation5 + $0x128] sm:$0xff]
    %v91 = vld [vmem:[#allocation5 + $0x130] sm:$0xff]
    %v92 = vld [vmem:[#allocation5 + $0x138] sm:$0xff]
    %v93 = vld [vmem:[#allocation5 + $0x140] sm:$0xff]
    %v94 = vld [vmem:[#allocation5 + $0x148] sm:$0xff]
    %v95 = vld [vmem:[#allocation5 + $0x150] sm:$0xff]
    %v96 = vld [vmem:[#allocation5 + $0x158] sm:$0xff]
    %v97 = vld [vmem:[#allocation5 + $0x160] sm:$0xff]
    %v98 = vld [vmem:[#allocation5 + $0x168] sm:$0xff]
    %v99 = vld [vmem:[#allocation5 + $0x170] sm:$0xff]
    %v100 = vld [vmem:[#allocation5 + $0x178] sm:$0xff]
    %v101 = vld [vmem:[#allocation5 + $0x180] sm:$0xff]
    %v102 = vld [vmem:[#allocation5 + $0x188] sm:$0xff]
    %v103 = vld [vmem:[#allocation5 + $0x190] sm:$0xff]
    %v104 = vld [vmem:[#allocation5 + $0x198] sm:$0xff]
    %v105 = vld [vmem:[#allocation5 + $0x1a0] sm:$0xff]
    %v106 = vld [vmem:[#allocation5 + $0x1a8] sm:$0xff]
    %v107 = vld [vmem:[#allocation5 + $0x1b0] sm:$0xff]
    %v108 = vld [vmem:[#allocation5 + $0x1b8] sm:$0xff]
    %v109 = vld [vmem:[#allocation5 + $0x1c0] sm:$0xff]
    %v110 = vld [vmem:[#allocation5 + $0x1c8] sm:$0xff]
    %v111 = vld [vmem:[#allocation5 + $0x1d0] sm:$0xff]
    %v112 = vld [vmem:[#allocation5 + $0x1d8] sm:$0xff]
    %v113 = vld [vmem:[#allocation5 + $0x1e0] sm:$0xff]
    %v114 = vld [vmem:[#allocation5 + $0x1e8] sm:$0xff]
    %v115 = vld [vmem:[#allocation5 + $0x1f0] sm:$0xff]
    %v116 = vld [vmem:[#allocation5 + $0x1f8] sm:$0xff]
    %v117 = vld [vmem:[#allocation5 + $0x200] sm:$0xff]
    %v118 = vld [vmem:[#allocation5 + $0x208] sm:$0xff]
    %v119 = vld [vmem:[#allocation5 + $0x210] sm:$0xff]
    %v120 = vld [vmem:[#allocation5 + $0x218] sm:$0xff]
    %v121 = vld [vmem:[#allocation5 + $0x220] sm:$0xff]
    %v122 = vld [vmem:[#allocation5 + $0x228] sm:$0xff]
    %v123 = vld [vmem:[#allocation5 + $0x230] sm:$0xff]
    %v124 = vld [vmem:[#allocation5 + $0x238] sm:$0xff]
    %v125 = vld [vmem:[#allocation5 + $0x240] sm:$0xff]
    %v126 = vld [vmem:[#allocation5 + $0x248] sm:$0xff]
    %v127 = vld [vmem:[#allocation5 + $0x250] sm:$0xff]
    %v128 = vld [vmem:[#allocation5 + $0x258] sm:$0xff]
    %v129 = vld [vmem:[#allocation5 + $0x260] sm:$0xff]
    %v130 = vld [vmem:[#allocation5 + $0x268] sm:$0xff]
    %v131 = vld [vmem:[#allocation5 + $0x270] sm:$0xff]
    %v132 = vld [vmem:[#allocation5 + $0x278] sm:$0xff]
    %v133 = vld [vmem:[#allocation5 + $0x280] sm:$0xff]
    %v134 = vld [vmem:[#allocation5 + $0x288] sm:$0xff]
    %v135 = vld [vmem:[#allocation5 + $0x290] sm:$0xff]
    %v136 = vld [vmem:[#allocation5 + $0x298] sm:$0xff]
    %v137 = vld [vmem:[#allocation5 + $0x2a0] sm:$0xff]
    %v138 = vld [vmem:[#allocation5 + $0x2a8] sm:$0xff]
    %v139 = vld [vmem:[#allocation5 + $0x2b0] sm:$0xff]
    %v140 = vld [vmem:[#allocation5 + $0x2b8] sm:$0xff]
    %v141 = vld [vmem:[#allocation5 + $0x2c0] sm:$0xff]
    %v142 = vld [vmem:[#allocation5 + $0x2c8] sm:$0xff]
    %v143 = vld [vmem:[#allocation5 + $0x2d0] sm:$0xff]
    %v144 = vld [vmem:[#allocation5 + $0x2d8] sm:$0xff]
    %v145 = vld [vmem:[#allocation5 + $0x2e0] sm:$0xff]
    %v146 = vld [vmem:[#allocation5 + $0x2e8] sm:$0xff]
    %v147 = vld [vmem:[#allocation5 + $0x2f0] sm:$0xff]
    %v148 = vld [vmem:[#allocation5 + $0x2f8] sm:$0xff]
    %v149 = vld [vmem:[#allocation7] sm:$0xff]
    %v151 = vlaneseq
    %v152 = vshrl.u32 %v151, 7
    %v153 = vsub.s32 0, %v152
    %v154 = vrot.slane %v149, %v153
    %v155 = vlaneseq
    %v156 = vshrl.u32 %v155, 7
    %v157 = vsub.s32 1, %v156
    %v158 = vrot.slane %v149, %v157
    %v159 = vlaneseq
    %v160 = vshrl.u32 %v159, 7
    %v161 = vsub.s32 2, %v160
    %v162 = vrot.slane %v149, %v161
    %v163 = vlaneseq
    %v164 = vshrl.u32 %v163, 7
    %v165 = vsub.s32 3, %v164
    %v166 = vrot.slane %v149, %v165
    %v167 = vlaneseq
    %v168 = vshrl.u32 %v167, 7
    %v169 = vsub.s32 4, %v168
    %v170 = vrot.slane %v149, %v169
    %v171 = vlaneseq
    %v172 = vshrl.u32 %v171, 7
    %v173 = vsub.s32 5, %v172
    %v174 = vrot.slane %v149, %v173
    %v175 = vlaneseq
    %v176 = vshrl.u32 %v175, 7
    %v177 = vsub.s32 6, %v176
    %v178 = vrot.slane %v149, %v177
    %v179 = vlaneseq
    %v180 = vshrl.u32 %v179, 7
    %v181 = vsub.s32 7, %v180
    %v182 = vrot.slane %v149, %v181
    %vm191 = vcmask 785408
    %v193 = vsel %vm191, %v52, 0
    %v195 = vand.u32 %v54, 4294901760
    %196 = vmatprep.subr.mxu0 %v195
    %v197 = vand.u32 %v53, 4294901760
    %198 = vmatpush1.msra.mxu0 %v197
    %v199 = vand.u32 %v62, 4294901760
    %200 = vmatprep.subr.mxu0 %v199
    %v201 = vand.u32 %v61, 4294901760
    %202 = vmatpush1.msra.mxu0 %v201
    %v203 = vand.u32 %v70, 4294901760
    %204 = vmatprep.subr.mxu0 %v203
    %v205 = vand.u32 %v69, 4294901760
    %206 = vmatpush1.msra.mxu0 %v205
    %v207 = vand.u32 %v78, 4294901760
    %208 = vmatprep.subr.mxu0 %v207
    %v209 = vand.u32 %v77, 4294901760
    %210 = vmatpush1.msra.mxu0 %v209
    %v211 = vand.u32 %v86, 4294901760
    %212 = vmatprep.subr.mxu0 %v211
    %v213 = vand.u32 %v85, 4294901760
    %214 = vmatpush1.msra.mxu0 %v213
    %v215 = vand.u32 %v94, 4294901760
    %216 = vmatprep.subr.mxu0 %v215
    %v217 = vand.u32 %v93, 4294901760
    %218 = vmatpush1.msra.mxu0 %v217
    %v219 = vand.u32 %v102, 4294901760
    %220 = vmatprep.subr.mxu0 %v219
    %v221 = vand.u32 %v101, 4294901760
    %222 = vmatpush1.msra.mxu0 %v221
    %v223 = vand.u32 %v110, 4294901760
    %224 = vmatprep.subr.mxu0 %v223
    %v225 = vand.u32 %v109, 4294901760
    %226 = vmatpush1.msra.mxu0 %v225
    %v227 = vand.u32 %v118, 4294901760
    %228 = vmatprep.subr.mxu0 %v227
    %v229 = vand.u32 %v117, 4294901760
    %230 = vmatpush1.msra.mxu0 %v229
    %v231 = vand.u32 %v126, 4294901760
    %232 = vmatprep.subr.mxu0 %v231
    %v233 = vand.u32 %v125, 4294901760
    %234 = vmatpush1.msra.mxu0 %v233
    %v235 = vand.u32 %v134, 4294901760
    %236 = vmatprep.subr.mxu0 %v235
    %v237 = vand.u32 %v133, 4294901760
    %238 = vmatpush1.msra.mxu0 %v237
    %v239 = vand.u32 %v142, 4294901760
    %240 = vmatprep.subr.mxu0 %v239
    %v241 = vand.u32 %v141, 4294901760
    %242 = vmatpush1.msra.mxu0 %v241
    %243 = vmatprep.subr.mxu0 0.0
    %244 = vmatpush1.msra.mxu0 0.0
    %245 = vmatprep.subr.mxu0 0.0
    %246 = vmatpush1.msra.mxu0 0.0
    %247 = vmatprep.subr.mxu0 0.0
    %248 = vmatpush1.msra.mxu0 0.0
    %249 = vmatprep.subr.mxu0 0.0
    %250 = vmatpush1.msra.mxu0 0.0
    %251 = vmatprep.subr.mxu0 0.0
    %252 = vmatpush1.msra.mxu0 0.0
    %253 = vmatprep.subr.mxu0 0.0
    %254 = vmatpush1.msra.mxu0 0.0
    %255 = vmatprep.subr.mxu0 0.0
    %256 = vmatpush1.msra.mxu0 0.0
    %257 = vmatprep.subr.mxu0 0.0
    %258 = vmatpush1.msra.mxu0 0.0
    %259 = vmatprep.subr.mxu0 0.0
    %260 = vmatpush1.msra.mxu0 0.0
    %261 = vmatprep.subr.mxu0 0.0
    %262 = vmatpush1.msra.mxu0 0.0
    %263 = vmatprep.subr.mxu0 0.0
    %264 = vmatpush1.msra.mxu0 0.0
    %265 = vmatprep.subr.mxu0 0.0
    %266 = vmatpush1.msra.mxu0 0.0
    %267 = vmatprep.subr.mxu0 0.0
    %268 = vmatpush1.msra.mxu0 0.0
    %269 = vmatprep.subr.mxu0 0.0
    %270 = vmatpush1.msra.mxu0 0.0
    %271 = vmatprep.subr.mxu0 0.0
    %272 = vmatpush1.msra.mxu0 0.0
    %273 = vmatprep.subr.mxu0 0.0
    %274 = vmatpush1.msra.mxu0 0.0
    %275 = vmatprep.subr.mxu0 0.0
    %276 = vmatpush1.msra.mxu0 0.0
    %277 = vmatprep.subr.mxu0 0.0
    %278 = vmatpush1.msra.mxu0 0.0
    %279 = vmatprep.subr.mxu0 0.0
    %280 = vmatpush1.msra.mxu0 0.0
    %281 = vmatprep.subr.mxu0 0.0
    %282 = vmatpush1.msra.mxu0 0.0
    %283 = vmatprep.mubr.f32.mxu0 0.0
    %v284 = vand.u32 %v193, 4294901760
    %v285 = vsub.f32 %v193, %v284
    %v286 = vand.u32 %v285, 4294901760
    %v287 = vsub.f32 %v285, %v286
    %v288 = vand.u32 %v287, 4294901760
    %289 = vmatmul.mubr.f32.gmra.mrb[0].mxu0 %v288
    %v290 = vpop.f32.mrb[0].mxu0
    %v291 = vadd.f32 %v154, %v290
    %v292 = vpop.f32.mrb[0].mxu0
    %v293 = vadd.f32 %v158, %v292
    %294 = vdwg.mxu0
    %v295 = vand.u32 %v54, 4294901760
    %v296 = vsub.f32 %v54, %v295
    %v297 = vand.u32 %v296, 4294901760
    %v298 = vsub.f32 %v296, %v297
    %v299 = vand.u32 %v298, 4294901760
    %300 = vmatprep.subr.mxu0 %v299
    %v301 = vand.u32 %v53, 4294901760
    %v302 = vsub.f32 %v53, %v301
    %v303 = vand.u32 %v302, 4294901760
    %v304 = vsub.f32 %v302, %v303
    %v305 = vand.u32 %v304, 4294901760
    %306 = vmatpush1.msra.mxu0 %v305
    %v307 = vand.u32 %v62, 4294901760
    %v308 = vsub.f32 %v62, %v307
    %v309 = vand.u32 %v308, 4294901760
    %v310 = vsub.f32 %v308, %v309
    %v311 = vand.u32 %v310, 4294901760
    %312 = vmatprep.subr.mxu0 %v311
    %v313 = vand.u32 %v61, 4294901760
    %v314 = vsub.f32 %v61, %v313
    %v315 = vand.u32 %v314, 4294901760
    %v316 = vsub.f32 %v314, %v315
    %v317 = vand.u32 %v316, 4294901760
    %318 = vmatpush1.msra.mxu0 %v317
    %v319 = vand.u32 %v70, 4294901760
    %v320 = vsub.f32 %v70, %v319
    %v321 = vand.u32 %v320, 4294901760
    %v322 = vsub.f32 %v320, %v321
    %v323 = vand.u32 %v322, 4294901760
    %324 = vmatprep.subr.mxu0 %v323
    %v325 = vand.u32 %v69, 4294901760
    %v326 = vsub.f32 %v69, %v325
    %v327 = vand.u32 %v326, 4294901760
    %v328 = vsub.f32 %v326, %v327
    %v329 = vand.u32 %v328, 4294901760
    %330 = vmatpush1.msra.mxu0 %v329
    %v331 = vand.u32 %v78, 4294901760
    %v332 = vsub.f32 %v78, %v331
    %v333 = vand.u32 %v332, 4294901760
    %v334 = vsub.f32 %v332, %v333
    %v335 = vand.u32 %v334, 4294901760
    %336 = vmatprep.subr.mxu0 %v335
    %v337 = vand.u32 %v77, 4294901760
    %v338 = vsub.f32 %v77, %v337
    %v339 = vand.u32 %v338, 4294901760
    %v340 = vsub.f32 %v338, %v339
    %v341 = vand.u32 %v340, 4294901760
    %342 = vmatpush1.msra.mxu0 %v341
    %v343 = vand.u32 %v86, 4294901760
    %v344 = vsub.f32 %v86, %v343
    %v345 = vand.u32 %v344, 4294901760
    %v346 = vsub.f32 %v344, %v345
    %v347 = vand.u32 %v346, 4294901760
    %348 = vmatprep.subr.mxu0 %v347
    %v349 = vand.u32 %v85, 4294901760
    %v350 = vsub.f32 %v85, %v349
    %v351 = vand.u32 %v350, 4294901760
    %v352 = vsub.f32 %v350, %v351
    %v353 = vand.u32 %v352, 4294901760
    %354 = vmatpush1.msra.mxu0 %v353
    %v355 = vand.u32 %v94, 4294901760
    %v356 = vsub.f32 %v94, %v355
    %v357 = vand.u32 %v356, 4294901760
    %v358 = vsub.f32 %v356, %v357
    %v359 = vand.u32 %v358, 4294901760
    %360 = vmatprep.subr.mxu0 %v359
    %v361 = vand.u32 %v93, 4294901760
    %v362 = vsub.f32 %v93, %v361
    %v363 = vand.u32 %v362, 4294901760
    %v364 = vsub.f32 %v362, %v363
    %v365 = vand.u32 %v364, 4294901760
    %366 = vmatpush1.msra.mxu0 %v365
    %v367 = vand.u32 %v102, 4294901760
    %v368 = vsub.f32 %v102, %v367
    %v369 = vand.u32 %v368, 4294901760
    %v370 = vsub.f32 %v368, %v369
    %v371 = vand.u32 %v370, 4294901760
    %372 = vmatprep.subr.mxu0 %v371
    %v373 = vand.u32 %v101, 4294901760
    %v374 = vsub.f32 %v101, %v373
    %v375 = vand.u32 %v374, 4294901760
    %v376 = vsub.f32 %v374, %v375
    %v377 = vand.u32 %v376, 4294901760
    %378 = vmatpush1.msra.mxu0 %v377
    %v379 = vand.u32 %v110, 4294901760
    %v380 = vsub.f32 %v110, %v379
    %v381 = vand.u32 %v380, 4294901760
    %v382 = vsub.f32 %v380, %v381
    %v383 = vand.u32 %v382, 4294901760
    %384 = vmatprep.subr.mxu0 %v383
    %v385 = vand.u32 %v109, 4294901760
    %v386 = vsub.f32 %v109, %v385
    %v387 = vand.u32 %v386, 4294901760
    %v388 = vsub.f32 %v386, %v387
    %v389 = vand.u32 %v388, 4294901760
    %390 = vmatpush1.msra.mxu0 %v389
    %v391 = vand.u32 %v118, 4294901760
    %v392 = vsub.f32 %v118, %v391
    %v393 = vand.u32 %v392, 4294901760
    %v394 = vsub.f32 %v392, %v393
    %v395 = vand.u32 %v394, 4294901760
    %396 = vmatprep.subr.mxu0 %v395
    %v397 = vand.u32 %v117, 4294901760
    %v398 = vsub.f32 %v117, %v397
    %v399 = vand.u32 %v398, 4294901760
    %v400 = vsub.f32 %v398, %v399
    %v401 = vand.u32 %v400, 4294901760
    %402 = vmatpush1.msra.mxu0 %v401
    %v403 = vand.u32 %v126, 4294901760
    %v404 = vsub.f32 %v126, %v403
    %v405 = vand.u32 %v404, 4294901760
    %v406 = vsub.f32 %v404, %v405
    %v407 = vand.u32 %v406, 4294901760
    %408 = vmatprep.subr.mxu0 %v407
    %v409 = vand.u32 %v125, 4294901760
    %v410 = vsub.f32 %v125, %v409
    %v411 = vand.u32 %v410, 4294901760
    %v412 = vsub.f32 %v410, %v411
    %v413 = vand.u32 %v412, 4294901760
    %414 = vmatpush1.msra.mxu0 %v413
    %v415 = vand.u32 %v134, 4294901760
    %v416 = vsub.f32 %v134, %v415
    %v417 = vand.u32 %v416, 4294901760
    %v418 = vsub.f32 %v416, %v417
    %v419 = vand.u32 %v418, 4294901760
    %420 = vmatprep.subr.mxu0 %v419
    %v421 = vand.u32 %v133, 4294901760
    %v422 = vsub.f32 %v133, %v421
    %v423 = vand.u32 %v422, 4294901760
    %v424 = vsub.f32 %v422, %v423
    %v425 = vand.u32 %v424, 4294901760
    %426 = vmatpush1.msra.mxu0 %v425
    %v427 = vand.u32 %v142, 4294901760
    %v428 = vsub.f32 %v142, %v427
    %v429 = vand.u32 %v428, 4294901760
    %v430 = vsub.f32 %v428, %v429
    %v431 = vand.u32 %v430, 4294901760
    %432 = vmatprep.subr.mxu0 %v431
    %v433 = vand.u32 %v141, 4294901760
    %v434 = vsub.f32 %v141, %v433
    %v435 = vand.u32 %v434, 4294901760
    %v436 = vsub.f32 %v434, %v435
    %v437 = vand.u32 %v436, 4294901760
    %438 = vmatpush1.msra.mxu0 %v437
    %439 = vmatprep.subr.mxu0 0.0
    %440 = vmatpush1.msra.mxu0 0.0
    %441 = vmatprep.subr.mxu0 0.0
    %442 = vmatpush1.msra.mxu0 0.0
    %443 = vmatprep.subr.mxu0 0.0
    %444 = vmatpush1.msra.mxu0 0.0
    %445 = vmatprep.subr.mxu0 0.0
    %446 = vmatpush1.msra.mxu0 0.0
    %447 = vmatprep.subr.mxu0 0.0
    %448 = vmatpush1.msra.mxu0 0.0
    %449 = vmatprep.subr.mxu0 0.0
    %450 = vmatpush1.msra.mxu0 0.0
    %451 = vmatprep.subr.mxu0 0.0
    %452 = vmatpush1.msra.mxu0 0.0
    %453 = vmatprep.subr.mxu0 0.0
    %454 = vmatpush1.msra.mxu0 0.0
    %455 = vmatprep.subr.mxu0 0.0
    %456 = vmatpush1.msra.mxu0 0.0
    %457 = vmatprep.subr.mxu0 0.0
    %458 = vmatpush1.msra.mxu0 0.0
    %459 = vmatprep.subr.mxu0 0.0
    %460 = vmatpush1.msra.mxu0 0.0
    %461 = vmatprep.subr.mxu0 0.0
    %462 = vmatpush1.msra.mxu0 0.0
    %463 = vmatprep.subr.mxu0 0.0
    %464 = vmatpush1.msra.mxu0 0.0
    %465 = vmatprep.subr.mxu0 0.0
    %466 = vmatpush1.msra.mxu0 0.0
    %467 = vmatprep.subr.mxu0 0.0
    %468 = vmatpush1.msra.mxu0 0.0
    %469 = vmatprep.subr.mxu0 0.0
    %470 = vmatpush1.msra.mxu0 0.0
    %471 = vmatprep.subr.mxu0 0.0
    %472 = vmatpush1.msra.mxu0 0.0
    %473 = vmatprep.subr.mxu0 0.0
    %474 = vmatpush1.msra.mxu0 0.0
    %475 = vmatprep.subr.mxu0 0.0
    %476 = vmatpush1.msra.mxu0 0.0
    %477 = vmatprep.subr.mxu0 0.0
    %478 = vmatpush1.msra.mxu0 0.0
    %479 = vmatprep.mubr.f32.mxu0 0.0
    %v480 = vand.u32 %v193, 4294901760
    %481 = vmatmul.mubr.f32.gmra.mrb[0].mxu0 %v480
    %v482 = vpop.f32.mrb[0].mxu0
    %v483 = vadd.f32 %v291, %v482
    %v484 = vpop.f32.mrb[0].mxu0
    %v485 = vadd.f32 %v293, %v484
    %486 = vdwg.mxu0
    %v487 = vand.u32 %v54, 4294901760
    %v488 = vsub.f32 %v54, %v487
    %489 = vmatprep.subr.mxu0 %v488
    %v490 = vand.u32 %v53, 4294901760
    %v491 = vsub.f32 %v53, %v490
    %492 = vmatpush1.msra.mxu0 %v491
    %v493 = vand.u32 %v62, 4294901760
    %v494 = vsub.f32 %v62, %v493
    %495 = vmatprep.subr.mxu0 %v494
    %v496 = vand.u32 %v61, 4294901760
    %v497 = vsub.f32 %v61, %v496
    %498 = vmatpush1.msra.mxu0 %v497
    %v499 = vand.u32 %v70, 4294901760
    %v500 = vsub.f32 %v70, %v499
    %501 = vmatprep.subr.mxu0 %v500
    %v502 = vand.u32 %v69, 4294901760
    %v503 = vsub.f32 %v69, %v502
    %504 = vmatpush1.msra.mxu0 %v503
    %v505 = vand.u32 %v78, 4294901760
    %v506 = vsub.f32 %v78, %v505
    %507 = vmatprep.subr.mxu0 %v506
    %v508 = vand.u32 %v77, 4294901760
    %v509 = vsub.f32 %v77, %v508
    %510 = vmatpush1.msra.mxu0 %v509
    %v511 = vand.u32 %v86, 4294901760
    %v512 = vsub.f32 %v86, %v511
    %513 = vmatprep.subr.mxu0 %v512
    %v514 = vand.u32 %v85, 4294901760
    %v515 = vsub.f32 %v85, %v514
    %516 = vmatpush1.msra.mxu0 %v515
    %v517 = vand.u32 %v94, 4294901760
    %v518 = vsub.f32 %v94, %v517
    %519 = vmatprep.subr.mxu0 %v518
    %v520 = vand.u32 %v93, 4294901760
    %v521 = vsub.f32 %v93, %v520
    %522 = vmatpush1.msra.mxu0 %v521
    %v523 = vand.u32 %v102, 4294901760
    %v524 = vsub.f32 %v102, %v523
    %525 = vmatprep.subr.mxu0 %v524
    %v526 = vand.u32 %v101, 4294901760
    %v527 = vsub.f32 %v101, %v526
    %528 = vmatpush1.msra.mxu0 %v527
    %v529 = vand.u32 %v110, 4294901760
    %v530 = vsub.f32 %v110, %v529
    %531 = vmatprep.subr.mxu0 %v530
    %v532 = vand.u32 %v109, 4294901760
    %v533 = vsub.f32 %v109, %v532
    %534 = vmatpush1.msra.mxu0 %v533
    %v535 = vand.u32 %v118, 4294901760
    %v536 = vsub.f32 %v118, %v535
    %537 = vmatprep.subr.mxu0 %v536
    %v538 = vand.u32 %v117, 4294901760
    %v539 = vsub.f32 %v117, %v538
    %540 = vmatpush1.msra.mxu0 %v539
    %v541 = vand.u32 %v126, 4294901760
    %v542 = vsub.f32 %v126, %v541
    %543 = vmatprep.subr.mxu0 %v542
    %v544 = vand.u32 %v125, 4294901760
    %v545 = vsub.f32 %v125, %v544
    %546 = vmatpush1.msra.mxu0 %v545
    %v547 = vand.u32 %v134, 4294901760
    %v548 = vsub.f32 %v134, %v547
    %549 = vmatprep.subr.mxu0 %v548
    %v550 = vand.u32 %v133, 4294901760
    %v551 = vsub.f32 %v133, %v550
    %552 = vmatpush1.msra.mxu0 %v551
    %v553 = vand.u32 %v142, 4294901760
    %v554 = vsub.f32 %v142, %v553
    %555 = vmatprep.subr.mxu0 %v554
    %v556 = vand.u32 %v141, 4294901760
    %v557 = vsub.f32 %v141, %v556
    %558 = vmatpush1.msra.mxu0 %v557
    %559 = vmatprep.subr.mxu0 0.0
    %560 = vmatpush1.msra.mxu0 0.0
    %561 = vmatprep.subr.mxu0 0.0
    %562 = vmatpush1.msra.mxu0 0.0
    %563 = vmatprep.subr.mxu0 0.0
    %564 = vmatpush1.msra.mxu0 0.0
    %565 = vmatprep.subr.mxu0 0.0
    %566 = vmatpush1.msra.mxu0 0.0
    %567 = vmatprep.subr.mxu0 0.0
    %568 = vmatpush1.msra.mxu0 0.0
    %569 = vmatprep.subr.mxu0 0.0
    %570 = vmatpush1.msra.mxu0 0.0
    %571 = vmatprep.subr.mxu0 0.0
    %572 = vmatpush1.msra.mxu0 0.0
    %573 = vmatprep.subr.mxu0 0.0
    %574 = vmatpush1.msra.mxu0 0.0
    %575 = vmatprep.subr.mxu0 0.0
    %576 = vmatpush1.msra.mxu0 0.0
    %577 = vmatprep.subr.mxu0 0.0
    %578 = vmatpush1.msra.mxu0 0.0
    %579 = vmatprep.subr.mxu0 0.0
    %580 = vmatpush1.msra.mxu0 0.0
    %581 = vmatprep.subr.mxu0 0.0
    %582 = vmatpush1.msra.mxu0 0.0
    %583 = vmatprep.subr.mxu0 0.0
    %584 = vmatpush1.msra.mxu0 0.0
    %585 = vmatprep.subr.mxu0 0.0
    %586 = vmatpush1.msra.mxu0 0.0
    %587 = vmatprep.subr.mxu0 0.0
    %588 = vmatpush1.msra.mxu0 0.0
    %589 = vmatprep.subr.mxu0 0.0
    %590 = vmatpush1.msra.mxu0 0.0
    %591 = vmatprep.subr.mxu0 0.0
    %592 = vmatpush1.msra.mxu0 0.0
    %593 = vmatprep.subr.mxu0 0.0
    %594 = vmatpush1.msra.mxu0 0.0
    %595 = vmatprep.subr.mxu0 0.0
    %596 = vmatpush1.msra.mxu0 0.0
    %597 = vmatprep.subr.mxu0 0.0
    %598 = vmatpush1.msra.mxu0 0.0
    %599 = vmatprep.mubr.f32.mxu0 0.0
    %v600 = vand.u32 %v193, 4294901760
    %v601 = vsub.f32 %v193, %v600
    %602 = vmatmul.mubr.f32.gmra.mrb[0].mxu0 %v601
    %v603 = vpop.f32.mrb[0].mxu0
    %v604 = vadd.f32 %v483, %v603
    %v605 = vpop.f32.mrb[0].mxu0
    %v606 = vadd.f32 %v485, %v605
    %607 = vdwg.mxu0
    %v608 = vand.u32 %v54, 4294901760
    %609 = vmatprep.subr.mxu0 %v608
    %v610 = vand.u32 %v53, 4294901760
    %611 = vmatpush1.msra.mxu0 %v610
    %v612 = vand.u32 %v62, 4294901760
    %613 = vmatprep.subr.mxu0 %v612
    %v614 = vand.u32 %v61, 4294901760
    %615 = vmatpush1.msra.mxu0 %v614
    %v616 = vand.u32 %v70, 4294901760
    %617 = vmatprep.subr.mxu0 %v616
    %v618 = vand.u32 %v69, 4294901760
    %619 = vmatpush1.msra.mxu0 %v618
    %v620 = vand.u32 %v78, 4294901760
    %621 = vmatprep.subr.mxu0 %v620
    %v622 = vand.u32 %v77, 4294901760
    %623 = vmatpush1.msra.mxu0 %v622
    %v624 = vand.u32 %v86, 4294901760
    %625 = vmatprep.subr.mxu0 %v624
    %v626 = vand.u32 %v85, 4294901760
    %627 = vmatpush1.msra.mxu0 %v626
    %v628 = vand.u32 %v94, 4294901760
    %629 = vmatprep.subr.mxu0 %v628
    %v630 = vand.u32 %v93, 4294901760
    %631 = vmatpush1.msra.mxu0 %v630
    %v632 = vand.u32 %v102, 4294901760
    %633 = vmatprep.subr.mxu0 %v632
    %v634 = vand.u32 %v101, 4294901760
    %635 = vmatpush1.msra.mxu0 %v634
    %v636 = vand.u32 %v110, 4294901760
    %637 = vmatprep.subr.mxu0 %v636
    %v638 = vand.u32 %v109, 4294901760
    %639 = vmatpush1.msra.mxu0 %v638
    %v640 = vand.u32 %v118, 4294901760
    %641 = vmatprep.subr.mxu0 %v640
    %v642 = vand.u32 %v117, 4294901760
    %643 = vmatpush1.msra.mxu0 %v642
    %v644 = vand.u32 %v126, 4294901760
    %645 = vmatprep.subr.mxu0 %v644
    %v646 = vand.u32 %v125, 4294901760
    %647 = vmatpush1.msra.mxu0 %v646
    %v648 = vand.u32 %v134, 4294901760
    %649 = vmatprep.subr.mxu0 %v648
    %v650 = vand.u32 %v133, 4294901760
    %651 = vmatpush1.msra.mxu0 %v650
    %v652 = vand.u32 %v142, 4294901760
    %653 = vmatprep.subr.mxu0 %v652
    %v654 = vand.u32 %v141, 4294901760
    %655 = vmatpush1.msra.mxu0 %v654
    %656 = vmatprep.subr.mxu0 0.0
    %657 = vmatpush1.msra.mxu0 0.0
    %658 = vmatprep.subr.mxu0 0.0
    %659 = vmatpush1.msra.mxu0 0.0
    %660 = vmatprep.subr.mxu0 0.0
    %661 = vmatpush1.msra.mxu0 0.0
    %662 = vmatprep.subr.mxu0 0.0
    %663 = vmatpush1.msra.mxu0 0.0
    %664 = vmatprep.subr.mxu0 0.0
    %665 = vmatpush1.msra.mxu0 0.0
    %666 = vmatprep.subr.mxu0 0.0
    %667 = vmatpush1.msra.mxu0 0.0
    %668 = vmatprep.subr.mxu0 0.0
    %669 = vmatpush1.msra.mxu0 0.0
    %670 = vmatprep.subr.mxu0 0.0
    %671 = vmatpush1.msra.mxu0 0.0
    %672 = vmatprep.subr.mxu0 0.0
    %673 = vmatpush1.msra.mxu0 0.0
    %674 = vmatprep.subr.mxu0 0.0
    %675 = vmatpush1.msra.mxu0 0.0
    %676 = vmatprep.subr.mxu0 0.0
    %677 = vmatpush1.msra.mxu0 0.0
    %678 = vmatprep.subr.mxu0 0.0
    %679 = vmatpush1.msra.mxu0 0.0
    %680 = vmatprep.subr.mxu0 0.0
    %681 = vmatpush1.msra.mxu0 0.0
    %682 = vmatprep.subr.mxu0 0.0
    %683 = vmatpush1.msra.mxu0 0.0
    %684 = vmatprep.subr.mxu0 0.0
    %685 = vmatpush1.msra.mxu0 0.0
    %686 = vmatprep.subr.mxu0 0.0
    %687 = vmatpush1.msra.mxu0 0.0
    %688 = vmatprep.subr.mxu0 0.0
    %689 = vmatpush1.msra.mxu0 0.0
    %690 = vmatprep.subr.mxu0 0.0
    %691 = vmatpush1.msra.mxu0 0.0
    %692 = vmatprep.subr.mxu0 0.0
    %693 = vmatpush1.msra.mxu0 0.0
    %694 = vmatprep.subr.mxu0 0.0
    %695 = vmatpush1.msra.mxu0 0.0
    %696 = vmatprep.mubr.f32.mxu0 0.0
    %v697 = vand.u32 %v193, 4294901760
    %v698 = vsub.f32 %v193, %v697
    %v699 = vand.u32 %v698, 4294901760
    %700 = vmatmul.mubr.f32.gmra.mrb[0].mxu0 %v699
    %v701 = vpop.f32.mrb[0].mxu0
    %v702 = vadd.f32 %v604, %v701
    %v703 = vpop.f32.mrb[0].mxu0
    %v704 = vadd.f32 %v606, %v703
    %705 = vdwg.mxu0
    %v706 = vand.u32 %v54, 4294901760
    %v707 = vsub.f32 %v54, %v706
    %v708 = vand.u32 %v707, 4294901760
    %709 = vmatprep.subr.mxu0 %v708
    %v710 = vand.u32 %v53, 4294901760
    %v711 = vsub.f32 %v53, %v710
    %v712 = vand.u32 %v711, 4294901760
    %713 = vmatpush1.msra.mxu0 %v712
    %v714 = vand.u32 %v62, 4294901760
    %v715 = vsub.f32 %v62, %v714
    %v716 = vand.u32 %v715, 4294901760
    %717 = vmatprep.subr.mxu0 %v716
    %v718 = vand.u32 %v61, 4294901760
    %v719 = vsub.f32 %v61, %v718
    %v720 = vand.u32 %v719, 4294901760
    %721 = vmatpush1.msra.mxu0 %v720
    %v722 = vand.u32 %v70, 4294901760
    %v723 = vsub.f32 %v70, %v722
    %v724 = vand.u32 %v723, 4294901760
    %725 = vmatprep.subr.mxu0 %v724
    %v726 = vand.u32 %v69, 4294901760
    %v727 = vsub.f32 %v69, %v726
    %v728 = vand.u32 %v727, 4294901760
    %729 = vmatpush1.msra.mxu0 %v728
    %v730 = vand.u32 %v78, 4294901760
    %v731 = vsub.f32 %v78, %v730
    %v732 = vand.u32 %v731, 4294901760
    %733 = vmatprep.subr.mxu0 %v732
    %v734 = vand.u32 %v77, 4294901760
    %v735 = vsub.f32 %v77, %v734
    %v736 = vand.u32 %v735, 4294901760
    %737 = vmatpush1.msra.mxu0 %v736
    %v738 = vand.u32 %v86, 4294901760
    %v739 = vsub.f32 %v86, %v738
    %v740 = vand.u32 %v739, 4294901760
    %741 = vmatprep.subr.mxu0 %v740
    %v742 = vand.u32 %v85, 4294901760
    %v743 = vsub.f32 %v85, %v742
    %v744 = vand.u32 %v743, 4294901760
    %745 = vmatpush1.msra.mxu0 %v744
    %v746 = vand.u32 %v94, 4294901760
    %v747 = vsub.f32 %v94, %v746
    %v748 = vand.u32 %v747, 4294901760
    %749 = vmatprep.subr.mxu0 %v748
    %v750 = vand.u32 %v93, 4294901760
    %v751 = vsub.f32 %v93, %v750
    %v752 = vand.u32 %v751, 4294901760
    %753 = vmatpush1.msra.mxu0 %v752
    %v754 = vand.u32 %v102, 4294901760
    %v755 = vsub.f32 %v102, %v754
    %v756 = vand.u32 %v755, 4294901760
    %757 = vmatprep.subr.mxu0 %v756
    %v758 = vand.u32 %v101, 4294901760
    %v759 = vsub.f32 %v101, %v758
    %v760 = vand.u32 %v759, 4294901760
    %761 = vmatpush1.msra.mxu0 %v760
    %v762 = vand.u32 %v110, 4294901760
    %v763 = vsub.f32 %v110, %v762
    %v764 = vand.u32 %v763, 4294901760
    %765 = vmatprep.subr.mxu0 %v764
    %v766 = vand.u32 %v109, 4294901760
    %v767 = vsub.f32 %v109, %v766
    %v768 = vand.u32 %v767, 4294901760
    %769 = vmatpush1.msra.mxu0 %v768
    %v770 = vand.u32 %v118, 4294901760
    %v771 = vsub.f32 %v118, %v770
    %v772 = vand.u32 %v771, 4294901760
    %773 = vmatprep.subr.mxu0 %v772
    %v774 = vand.u32 %v117, 4294901760
    %v775 = vsub.f32 %v117, %v774
    %v776 = vand.u32 %v775, 4294901760
    %777 = vmatpush1.msra.mxu0 %v776
    %v778 = vand.u32 %v126, 4294901760
    %v779 = vsub.f32 %v126, %v778
    %v780 = vand.u32 %v779, 4294901760
    %781 = vmatprep.subr.mxu0 %v780
    %v782 = vand.u32 %v125, 4294901760
    %v783 = vsub.f32 %v125, %v782
    %v784 = vand.u32 %v783, 4294901760
    %785 = vmatpush1.msra.mxu0 %v784
    %v786 = vand.u32 %v134, 4294901760
    %v787 = vsub.f32 %v134, %v786
    %v788 = vand.u32 %v787, 4294901760
    %789 = vmatprep.subr.mxu0 %v788
    %v790 = vand.u32 %v133, 4294901760
    %v791 = vsub.f32 %v133, %v790
    %v792 = vand.u32 %v791, 4294901760
    %793 = vmatpush1.msra.mxu0 %v792
    %v794 = vand.u32 %v142, 4294901760
    %v795 = vsub.f32 %v142, %v794
    %v796 = vand.u32 %v795, 4294901760
    %797 = vmatprep.subr.mxu0 %v796
    %v798 = vand.u32 %v141, 4294901760
    %v799 = vsub.f32 %v141, %v798
    %v800 = vand.u32 %v799, 4294901760
    %801 = vmatpush1.msra.mxu0 %v800
    %802 = vmatprep.subr.mxu0 0.0
    %803 = vmatpush1.msra.mxu0 0.0
    %804 = vmatprep.subr.mxu0 0.0
    %805 = vmatpush1.msra.mxu0 0.0
    %806 = vmatprep.subr.mxu0 0.0
    %807 = vmatpush1.msra.mxu0 0.0
    %808 = vmatprep.subr.mxu0 0.0
    %809 = vmatpush1.msra.mxu0 0.0
    %810 = vmatprep.subr.mxu0 0.0
    %811 = vmatpush1.msra.mxu0 0.0
    %812 = vmatprep.subr.mxu0 0.0
    %813 = vmatpush1.msra.mxu0 0.0
    %814 = vmatprep.subr.mxu0 0.0
    %815 = vmatpush1.msra.mxu0 0.0
    %816 = vmatprep.subr.mxu0 0.0
    %817 = vmatpush1.msra.mxu0 0.0
    %818 = vmatprep.subr.mxu0 0.0
    %819 = vmatpush1.msra.mxu0 0.0
    %820 = vmatprep.subr.mxu0 0.0
    %821 = vmatpush1.msra.mxu0 0.0
    %822 = vmatprep.subr.mxu0 0.0
    %823 = vmatpush1.msra.mxu0 0.0
    %824 = vmatprep.subr.mxu0 0.0
    %825 = vmatpush1.msra.mxu0 0.0
    %826 = vmatprep.subr.mxu0 0.0
    %827 = vmatpush1.msra.mxu0 0.0
    %828 = vmatprep.subr.mxu0 0.0
    %829 = vmatpush1.msra.mxu0 0.0
    %830 = vmatprep.subr.mxu0 0.0
    %831 = vmatpush1.msra.mxu0 0.0
    %832 = vmatprep.subr.mxu0 0.0
    %833 = vmatpush1.msra.mxu0 0.0
    %834 = vmatprep.subr.mxu0 0.0
    %835 = vmatpush1.msra.mxu0 0.0
    %836 = vmatprep.subr.mxu0 0.0
    %837 = vmatpush1.msra.mxu0 0.0
    %838 = vmatprep.subr.mxu0 0.0
    %839 = vmatpush1.msra.mxu0 0.0
    %840 = vmatprep.subr.mxu0 0.0
    %841 = vmatpush1.msra.mxu0 0.0
    %842 = vmatprep.mubr.f32.mxu0 0.0
    %v843 = vand.u32 %v193, 4294901760
    %844 = vmatmul.mubr.f32.gmra.mrb[0].mxu0 %v843
    %v845 = vpop.f32.mrb[0].mxu0
    %v846 = vadd.f32 %v702, %v845
    %v847 = vpop.f32.mrb[0].mxu0
    %v848 = vadd.f32 %v704, %v847
    %849 = vdwg.mxu0
    %v850 = vand.u32 %v54, 4294901760
    %851 = vmatprep.subr.mxu0 %v850
    %v852 = vand.u32 %v53, 4294901760
    %853 = vmatpush1.msra.mxu0 %v852
    %v854 = vand.u32 %v62, 4294901760
    %855 = vmatprep.subr.mxu0 %v854
    %v856 = vand.u32 %v61, 4294901760
    %857 = vmatpush1.msra.mxu0 %v856
    %v858 = vand.u32 %v70, 4294901760
    %859 = vmatprep.subr.mxu0 %v858
    %v860 = vand.u32 %v69, 4294901760
    %861 = vmatpush1.msra.mxu0 %v860
    %v862 = vand.u32 %v78, 4294901760
    %863 = vmatprep.subr.mxu0 %v862
    %v864 = vand.u32 %v77, 4294901760
    %865 = vmatpush1.msra.mxu0 %v864
    %v866 = vand.u32 %v86, 4294901760
    %867 = vmatprep.subr.mxu0 %v866
    %v868 = vand.u32 %v85, 4294901760
    %869 = vmatpush1.msra.mxu0 %v868
    %v870 = vand.u32 %v94, 4294901760
    %871 = vmatprep.subr.mxu0 %v870
    %v872 = vand.u32 %v93, 4294901760
    %873 = vmatpush1.msra.mxu0 %v872
    %v874 = vand.u32 %v102, 4294901760
    %875 = vmatprep.subr.mxu0 %v874
    %v876 = vand.u32 %v101, 4294901760
    %877 = vmatpush1.msra.mxu0 %v876
    %v878 = vand.u32 %v110, 4294901760
    %879 = vmatprep.subr.mxu0 %v878
    %v880 = vand.u32 %v109, 4294901760
    %881 = vmatpush1.msra.mxu0 %v880
    %v882 = vand.u32 %v118, 4294901760
    %883 = vmatprep.subr.mxu0 %v882
    %v884 = vand.u32 %v117, 4294901760
    %885 = vmatpush1.msra.mxu0 %v884
    %v886 = vand.u32 %v126, 4294901760
    %887 = vmatprep.subr.mxu0 %v886
    %v888 = vand.u32 %v125, 4294901760
    %889 = vmatpush1.msra.mxu0 %v888
    %v890 = vand.u32 %v134, 4294901760
    %891 = vmatprep.subr.mxu0 %v890
    %v892 = vand.u32 %v133, 4294901760
    %893 = vmatpush1.msra.mxu0 %v892
    %v894 = vand.u32 %v142, 4294901760
    %895 = vmatprep.subr.mxu0 %v894
    %v896 = vand.u32 %v141, 4294901760
    %897 = vmatpush1.msra.mxu0 %v896
    %898 = vmatprep.subr.mxu0 0.0
    %899 = vmatpush1.msra.mxu0 0.0
    %900 = vmatprep.subr.mxu0 0.0
    %901 = vmatpush1.msra.mxu0 0.0
    %902 = vmatprep.subr.mxu0 0.0
    %903 = vmatpush1.msra.mxu0 0.0
    %904 = vmatprep.subr.mxu0 0.0
    %905 = vmatpush1.msra.mxu0 0.0
    %906 = vmatprep.subr.mxu0 0.0
    %907 = vmatpush1.msra.mxu0 0.0
    %908 = vmatprep.subr.mxu0 0.0
    %909 = vmatpush1.msra.mxu0 0.0
    %910 = vmatprep.subr.mxu0 0.0
    %911 = vmatpush1.msra.mxu0 0.0
    %912 = vmatprep.subr.mxu0 0.0
    %913 = vmatpush1.msra.mxu0 0.0
    %914 = vmatprep.subr.mxu0 0.0
    %915 = vmatpush1.msra.mxu0 0.0
    %916 = vmatprep.subr.mxu0 0.0
    %917 = vmatpush1.msra.mxu0 0.0
    %918 = vmatprep.subr.mxu0 0.0
    %919 = vmatpush1.msra.mxu0 0.0
    %920 = vmatprep.subr.mxu0 0.0
    %921 = vmatpush1.msra.mxu0 0.0
    %922 = vmatprep.subr.mxu0 0.0
    %923 = vmatpush1.msra.mxu0 0.0
    %924 = vmatprep.subr.mxu0 0.0
    %925 = vmatpush1.msra.mxu0 0.0
    %926 = vmatprep.subr.mxu0 0.0
    %927 = vmatpush1.msra.mxu0 0.0
    %928 = vmatprep.subr.mxu0 0.0
    %929 = vmatpush1.msra.mxu0 0.0
    %930 = vmatprep.subr.mxu0 0.0
    %931 = vmatpush1.msra.mxu0 0.0
    %932 = vmatprep.subr.mxu0 0.0
    %933 = vmatpush1.msra.mxu0 0.0
    %934 = vmatprep.subr.mxu0 0.0
    %935 = vmatpush1.msra.mxu0 0.0
    %936 = vmatprep.subr.mxu0 0.0
    %937 = vmatpush1.msra.mxu0 0.0
    %938 = vmatprep.mubr.f32.mxu0 0.0
    %v939 = vand.u32 %v193, 4294901760
    %940 = vmatmul.mubr.f32.gmra.mrb[0].mxu0 %v939
    %v941 = vpop.f32.mrb[0].mxu0
    %v942 = vadd.f32 %v846, %v941
    %v943 = vpop.f32.mrb[0].mxu0
    %v944 = vadd.f32 %v848, %v943
    %945 = vdwg.mxu0
    %v946 = vand.u32 %v56, 4294901760
    %947 = vmatprep.subr.mxu0 %v946
    %v948 = vand.u32 %v55, 4294901760
    %949 = vmatpush1.msra.mxu0 %v948
    %v950 = vand.u32 %v64, 4294901760
    %951 = vmatprep.subr.mxu0 %v950
    %v952 = vand.u32 %v63, 4294901760
    %953 = vmatpush1.msra.mxu0 %v952
    %v954 = vand.u32 %v72, 4294901760
    %955 = vmatprep.subr.mxu0 %v954
    %v956 = vand.u32 %v71, 4294901760
    %957 = vmatpush1.msra.mxu0 %v956
    %v958 = vand.u32 %v80, 4294901760
    %959 = vmatprep.subr.mxu0 %v958
    %v960 = vand.u32 %v79, 4294901760
    %961 = vmatpush1.msra.mxu0 %v960
    %v962 = vand.u32 %v88, 4294901760
    %963 = vmatprep.subr.mxu0 %v962
    %v964 = vand.u32 %v87, 4294901760
    %965 = vmatpush1.msra.mxu0 %v964
    %v966 = vand.u32 %v96, 4294901760
    %967 = vmatprep.subr.mxu0 %v966
    %v968 = vand.u32 %v95, 4294901760
    %969 = vmatpush1.msra.mxu0 %v968
    %v970 = vand.u32 %v104, 4294901760
    %971 = vmatprep.subr.mxu0 %v970
    %v972 = vand.u32 %v103, 4294901760
    %973 = vmatpush1.msra.mxu0 %v972
    %v974 = vand.u32 %v112, 4294901760
    %975 = vmatprep.subr.mxu0 %v974
    %v976 = vand.u32 %v111, 4294901760
    %977 = vmatpush1.msra.mxu0 %v976
    %v978 = vand.u32 %v120, 4294901760
    %979 = vmatprep.subr.mxu0 %v978
    %v980 = vand.u32 %v119, 4294901760
    %981 = vmatpush1.msra.mxu0 %v980
    %v982 = vand.u32 %v128, 4294901760
    %983 = vmatprep.subr.mxu0 %v982
    %v984 = vand.u32 %v127, 4294901760
    %985 = vmatpush1.msra.mxu0 %v984
    %v986 = vand.u32 %v136, 4294901760
    %987 = vmatprep.subr.mxu0 %v986
    %v988 = vand.u32 %v135, 4294901760
    %989 = vmatpush1.msra.mxu0 %v988
    %v990 = vand.u32 %v144, 4294901760
    %991 = vmatprep.subr.mxu0 %v990
    %v992 = vand.u32 %v143, 4294901760
    %993 = vmatpush1.msra.mxu0 %v992
    %994 = vmatprep.subr.mxu0 0.0
    %995 = vmatpush1.msra.mxu0 0.0
    %996 = vmatprep.subr.mxu0 0.0
    %997 = vmatpush1.msra.mxu0 0.0
    %998 = vmatprep.subr.mxu0 0.0
    %999 = vmatpush1.msra.mxu0 0.0
    %1000 = vmatprep.subr.mxu0 0.0
    %1001 = vmatpush1.msra.mxu0 0.0
    %1002 = vmatprep.subr.mxu0 0.0
    %1003 = vmatpush1.msra.mxu0 0.0
    %1004 = vmatprep.subr.mxu0 0.0
    %1005 = vmatpush1.msra.mxu0 0.0
    %1006 = vmatprep.subr.mxu0 0.0
    %1007 = vmatpush1.msra.mxu0 0.0
    %1008 = vmatprep.subr.mxu0 0.0
    %1009 = vmatpush1.msra.mxu0 0.0
    %1010 = vmatprep.subr.mxu0 0.0
    %1011 = vmatpush1.msra.mxu0 0.0
    %1012 = vmatprep.subr.mxu0 0.0
    %1013 = vmatpush1.msra.mxu0 0.0
    %1014 = vmatprep.subr.mxu0 0.0
    %1015 = vmatpush1.msra.mxu0 0.0
    %1016 = vmatprep.subr.mxu0 0.0
    %1017 = vmatpush1.msra.mxu0 0.0
    %1018 = vmatprep.subr.mxu0 0.0
    %1019 = vmatpush1.msra.mxu0 0.0
    %1020 = vmatprep.subr.mxu0 0.0
    %1021 = vmatpush1.msra.mxu0 0.0
    %1022 = vmatprep.subr.mxu0 0.0
    %1023 = vmatpush1.msra.mxu0 0.0
    %1024 = vmatprep.subr.mxu0 0.0
    %1025 = vmatpush1.msra.mxu0 0.0
    %1026 = vmatprep.subr.mxu0 0.0
    %1027 = vmatpush1.msra.mxu0 0.0
    %1028 = vmatprep.subr.mxu0 0.0
    %1029 = vmatpush1.msra.mxu0 0.0
    %1030 = vmatprep.subr.mxu0 0.0
    %1031 = vmatpush1.msra.mxu0 0.0
    %1032 = vmatprep.subr.mxu0 0.0
    %1033 = vmatpush1.msra.mxu0 0.0
    %1034 = vmatprep.mubr.f32.mxu0 0.0
    %v1035 = vand.u32 %v193, 4294901760
    %v1036 = vsub.f32 %v193, %v1035
    %v1037 = vand.u32 %v1036, 4294901760
    %v1038 = vsub.f32 %v1036, %v1037
    %v1039 = vand.u32 %v1038, 4294901760
    %1040 = vmatmul.mubr.f32.gmra.mrb[0].mxu0 %v1039
    %v1041 = vpop.f32.mrb[0].mxu0
    %v1042 = vadd.f32 %v162, %v1041
    %v1043 = vpop.f32.mrb[0].mxu0
    %v1044 = vadd.f32 %v166, %v1043
    %1045 = vdwg.mxu0
    %v1046 = vand.u32 %v56, 4294901760
    %v1047 = vsub.f32 %v56, %v1046
    %v1048 = vand.u32 %v1047, 4294901760
    %v1049 = vsub.f32 %v1047, %v1048
    %v1050 = vand.u32 %v1049, 4294901760
    %1051 = vmatprep.subr.mxu0 %v1050
    %v1052 = vand.u32 %v55, 4294901760
    %v1053 = vsub.f32 %v55, %v1052
    %v1054 = vand.u32 %v1053, 4294901760
    %v1055 = vsub.f32 %v1053, %v1054
    %v1056 = vand.u32 %v1055, 4294901760
    %1057 = vmatpush1.msra.mxu0 %v1056
    %v1058 = vand.u32 %v64, 4294901760
    %v1059 = vsub.f32 %v64, %v1058
    %v1060 = vand.u32 %v1059, 4294901760
    %v1061 = vsub.f32 %v1059, %v1060
    %v1062 = vand.u32 %v1061, 4294901760
    %1063 = vmatprep.subr.mxu0 %v1062
    %v1064 = vand.u32 %v63, 4294901760
    %v1065 = vsub.f32 %v63, %v1064
    %v1066 = vand.u32 %v1065, 4294901760
    %v1067 = vsub.f32 %v1065, %v1066
    %v1068 = vand.u32 %v1067, 4294901760
    %1069 = vmatpush1.msra.mxu0 %v1068
    %v1070 = vand.u32 %v72, 4294901760
    %v1071 = vsub.f32 %v72, %v1070
    %v1072 = vand.u32 %v1071, 4294901760
    %v1073 = vsub.f32 %v1071, %v1072
    %v1074 = vand.u32 %v1073, 4294901760
    %1075 = vmatprep.subr.mxu0 %v1074
    %v1076 = vand.u32 %v71, 4294901760
    %v1077 = vsub.f32 %v71, %v1076
    %v1078 = vand.u32 %v1077, 4294901760
    %v1079 = vsub.f32 %v1077, %v1078
    %v1080 = vand.u32 %v1079, 4294901760
    %1081 = vmatpush1.msra.mxu0 %v1080
    %v1082 = vand.u32 %v80, 4294901760
    %v1083 = vsub.f32 %v80, %v1082
    %v1084 = vand.u32 %v1083, 4294901760
    %v1085 = vsub.f32 %v1083, %v1084
    %v1086 = vand.u32 %v1085, 4294901760
    %1087 = vmatprep.subr.mxu0 %v1086
    %v1088 = vand.u32 %v79, 4294901760
    %v1089 = vsub.f32 %v79, %v1088
    %v1090 = vand.u32 %v1089, 4294901760
    %v1091 = vsub.f32 %v1089, %v1090
    %v1092 = vand.u32 %v1091, 4294901760
    %1093 = vmatpush1.msra.mxu0 %v1092
    %v1094 = vand.u32 %v88, 4294901760
    %v1095 = vsub.f32 %v88, %v1094
    %v1096 = vand.u32 %v1095, 4294901760
    %v1097 = vsub.f32 %v1095, %v1096
    %v1098 = vand.u32 %v1097, 4294901760
    %1099 = vmatprep.subr.mxu0 %v1098
    %v1100 = vand.u32 %v87, 4294901760
    %v1101 = vsub.f32 %v87, %v1100
    %v1102 = vand.u32 %v1101, 4294901760
    %v1103 = vsub.f32 %v1101, %v1102
    %v1104 = vand.u32 %v1103, 4294901760
    %1105 = vmatpush1.msra.mxu0 %v1104
    %v1106 = vand.u32 %v96, 4294901760
    %v1107 = vsub.f32 %v96, %v1106
    %v1108 = vand.u32 %v1107, 4294901760
    %v1109 = vsub.f32 %v1107, %v1108
    %v1110 = vand.u32 %v1109, 4294901760
    %1111 = vmatprep.subr.mxu0 %v1110
    %v1112 = vand.u32 %v95, 4294901760
    %v1113 = vsub.f32 %v95, %v1112
    %v1114 = vand.u32 %v1113, 4294901760
    %v1115 = vsub.f32 %v1113, %v1114
    %v1116 = vand.u32 %v1115, 4294901760
    %1117 = vmatpush1.msra.mxu0 %v1116
    %v1118 = vand.u32 %v104, 4294901760
    %v1119 = vsub.f32 %v104, %v1118
    %v1120 = vand.u32 %v1119, 4294901760
    %v1121 = vsub.f32 %v1119, %v1120
    %v1122 = vand.u32 %v1121, 4294901760
    %1123 = vmatprep.subr.mxu0 %v1122
    %v1124 = vand.u32 %v103, 4294901760
    %v1125 = vsub.f32 %v103, %v1124
    %v1126 = vand.u32 %v1125, 4294901760
    %v1127 = vsub.f32 %v1125, %v1126
    %v1128 = vand.u32 %v1127, 4294901760
    %1129 = vmatpush1.msra.mxu0 %v1128
    %v1130 = vand.u32 %v112, 4294901760
    %v1131 = vsub.f32 %v112, %v1130
    %v1132 = vand.u32 %v1131, 4294901760
    %v1133 = vsub.f32 %v1131, %v1132
    %v1134 = vand.u32 %v1133, 4294901760
    %1135 = vmatprep.subr.mxu0 %v1134
    %v1136 = vand.u32 %v111, 4294901760
    %v1137 = vsub.f32 %v111, %v1136
    %v1138 = vand.u32 %v1137, 4294901760
    %v1139 = vsub.f32 %v1137, %v1138
    %v1140 = vand.u32 %v1139, 4294901760
    %1141 = vmatpush1.msra.mxu0 %v1140
    %v1142 = vand.u32 %v120, 4294901760
    %v1143 = vsub.f32 %v120, %v1142
    %v1144 = vand.u32 %v1143, 4294901760
    %v1145 = vsub.f32 %v1143, %v1144
    %v1146 = vand.u32 %v1145, 4294901760
    %1147 = vmatprep.subr.mxu0 %v1146
    %v1148 = vand.u32 %v119, 4294901760
    %v1149 = vsub.f32 %v119, %v1148
    %v1150 = vand.u32 %v1149, 4294901760
    %v1151 = vsub.f32 %v1149, %v1150
    %v1152 = vand.u32 %v1151, 4294901760
    %1153 = vmatpush1.msra.mxu0 %v1152
    %v1154 = vand.u32 %v128, 4294901760
    %v1155 = vsub.f32 %v128, %v1154
    %v1156 = vand.u32 %v1155, 4294901760
    %v1157 = vsub.f32 %v1155, %v1156
    %v1158 = vand.u32 %v1157, 4294901760
    %1159 = vmatprep.subr.mxu0 %v1158
    %v1160 = vand.u32 %v127, 4294901760
    %v1161 = vsub.f32 %v127, %v1160
    %v1162 = vand.u32 %v1161, 4294901760
    %v1163 = vsub.f32 %v1161, %v1162
    %v1164 = vand.u32 %v1163, 4294901760
    %1165 = vmatpush1.msra.mxu0 %v1164
    %v1166 = vand.u32 %v136, 4294901760
    %v1167 = vsub.f32 %v136, %v1166
    %v1168 = vand.u32 %v1167, 4294901760
    %v1169 = vsub.f32 %v1167, %v1168
    %v1170 = vand.u32 %v1169, 4294901760
    %1171 = vmatprep.subr.mxu0 %v1170
    %v1172 = vand.u32 %v135, 4294901760
    %v1173 = vsub.f32 %v135, %v1172
    %v1174 = vand.u32 %v1173, 4294901760
    %v1175 = vsub.f32 %v1173, %v1174
    %v1176 = vand.u32 %v1175, 4294901760
    %1177 = vmatpush1.msra.mxu0 %v1176
    %v1178 = vand.u32 %v144, 4294901760
    %v1179 = vsub.f32 %v144, %v1178
    %v1180 = vand.u32 %v1179, 4294901760
    %v1181 = vsub.f32 %v1179, %v1180
    %v1182 = vand.u32 %v1181, 4294901760
    %1183 = vmatprep.subr.mxu0 %v1182
    %v1184 = vand.u32 %v143, 4294901760
    %v1185 = vsub.f32 %v143, %v1184
    %v1186 = vand.u32 %v1185, 4294901760
    %v1187 = vsub.f32 %v1185, %v1186
    %v1188 = vand.u32 %v1187, 4294901760
    %1189 = vmatpush1.msra.mxu0 %v1188
    %1190 = vmatprep.subr.mxu0 0.0
    %1191 = vmatpush1.msra.mxu0 0.0
    %1192 = vmatprep.subr.mxu0 0.0
    %1193 = vmatpush1.msra.mxu0 0.0
    %1194 = vmatprep.subr.mxu0 0.0
    %1195 = vmatpush1.msra.mxu0 0.0
    %1196 = vmatprep.subr.mxu0 0.0
    %1197 = vmatpush1.msra.mxu0 0.0
    %1198 = vmatprep.subr.mxu0 0.0
    %1199 = vmatpush1.msra.mxu0 0.0
    %1200 = vmatprep.subr.mxu0 0.0
    %1201 = vmatpush1.msra.mxu0 0.0
    %1202 = vmatprep.subr.mxu0 0.0
    %1203 = vmatpush1.msra.mxu0 0.0
    %1204 = vmatprep.subr.mxu0 0.0
    %1205 = vmatpush1.msra.mxu0 0.0
    %1206 = vmatprep.subr.mxu0 0.0
    %1207 = vmatpush1.msra.mxu0 0.0
    %1208 = vmatprep.subr.mxu0 0.0
    %1209 = vmatpush1.msra.mxu0 0.0
    %1210 = vmatprep.subr.mxu0 0.0
    %1211 = vmatpush1.msra.mxu0 0.0
    %1212 = vmatprep.subr.mxu0 0.0
    %1213 = vmatpush1.msra.mxu0 0.0
    %1214 = vmatprep.subr.mxu0 0.0
    %1215 = vmatpush1.msra.mxu0 0.0
    %1216 = vmatprep.subr.mxu0 0.0
    %1217 = vmatpush1.msra.mxu0 0.0
    %1218 = vmatprep.subr.mxu0 0.0
    %1219 = vmatpush1.msra.mxu0 0.0
    %1220 = vmatprep.subr.mxu0 0.0
    %1221 = vmatpush1.msra.mxu0 0.0
    %1222 = vmatprep.subr.mxu0 0.0
    %1223 = vmatpush1.msra.mxu0 0.0
    %1224 = vmatprep.subr.mxu0 0.0
    %1225 = vmatpush1.msra.mxu0 0.0
    %1226 = vmatprep.subr.mxu0 0.0
    %1227 = vmatpush1.msra.mxu0 0.0
    %1228 = vmatprep.subr.mxu0 0.0
    %1229 = vmatpush1.msra.mxu0 0.0
    %1230 = vmatprep.mubr.f32.mxu0 0.0
    %v1231 = vand.u32 %v193, 4294901760
    %1232 = vmatmul.mubr.f32.gmra.mrb[0].mxu0 %v1231
    %v1233 = vpop.f32.mrb[0].mxu0
    %v1234 = vadd.f32 %v1042, %v1233
    %v1235 = vpop.f32.mrb[0].mxu0
    %v1236 = vadd.f32 %v1044, %v1235
    %1237 = vdwg.mxu0
    %v1238 = vand.u32 %v56, 4294901760
    %v1239 = vsub.f32 %v56, %v1238
    %1240 = vmatprep.subr.mxu0 %v1239
    %v1241 = vand.u32 %v55, 4294901760
    %v1242 = vsub.f32 %v55, %v1241
    %1243 = vmatpush1.msra.mxu0 %v1242
    %v1244 = vand.u32 %v64, 4294901760
    %v1245 = vsub.f32 %v64, %v1244
    %1246 = vmatprep.subr.mxu0 %v1245
    %v1247 = vand.u32 %v63, 4294901760
    %v1248 = vsub.f32 %v63, %v1247
    %1249 = vmatpush1.msra.mxu0 %v1248
    %v1250 = vand.u32 %v72, 4294901760
    %v1251 = vsub.f32 %v72, %v1250
    %1252 = vmatprep.subr.mxu0 %v1251
    %v1253 = vand.u32 %v71, 4294901760
    %v1254 = vsub.f32 %v71, %v1253
    %1255 = vmatpush1.msra.mxu0 %v1254
    %v1256 = vand.u32 %v80, 4294901760
    %v1257 = vsub.f32 %v80, %v1256
    %1258 = vmatprep.subr.mxu0 %v1257
    %v1259 = vand.u32 %v79, 4294901760
    %v1260 = vsub.f32 %v79, %v1259
    %1261 = vmatpush1.msra.mxu0 %v1260
    %v1262 = vand.u32 %v88, 4294901760
    %v1263 = vsub.f32 %v88, %v1262
    %1264 = vmatprep.subr.mxu0 %v1263
    %v1265 = vand.u32 %v87, 4294901760
    %v1266 = vsub.f32 %v87, %v1265
    %1267 = vmatpush1.msra.mxu0 %v1266
    %v1268 = vand.u32 %v96, 4294901760
    %v1269 = vsub.f32 %v96, %v1268
    %1270 = vmatprep.subr.mxu0 %v1269
    %v1271 = vand.u32 %v95, 4294901760
    %v1272 = vsub.f32 %v95, %v1271
    %1273 = vmatpush1.msra.mxu0 %v1272
    %v1274 = vand.u32 %v104, 4294901760
    %v1275 = vsub.f32 %v104, %v1274
    %1276 = vmatprep.subr.mxu0 %v1275
    %v1277 = vand.u32 %v103, 4294901760
    %v1278 = vsub.f32 %v103, %v1277
    %1279 = vmatpush1.msra.mxu0 %v1278
    %v1280 = vand.u32 %v112, 4294901760
    %v1281 = vsub.f32 %v112, %v1280
    %1282 = vmatprep.subr.mxu0 %v1281
    %v1283 = vand.u32 %v111, 4294901760
    %v1284 = vsub.f32 %v111, %v1283
    %1285 = vmatpush1.msra.mxu0 %v1284
    %v1286 = vand.u32 %v120, 4294901760
    %v1287 = vsub.f32 %v120, %v1286
    %1288 = vmatprep.subr.mxu0 %v1287
    %v1289 = vand.u32 %v119, 4294901760
    %v1290 = vsub.f32 %v119, %v1289
    %1291 = vmatpush1.msra.mxu0 %v1290
    %v1292 = vand.u32 %v128, 4294901760
    %v1293 = vsub.f32 %v128, %v1292
    %1294 = vmatprep.subr.mxu0 %v1293
    %v1295 = vand.u32 %v127, 4294901760
    %v1296 = vsub.f32 %v127, %v1295
    %1297 = vmatpush1.msra.mxu0 %v1296
    %v1298 = vand.u32 %v136, 4294901760
    %v1299 = vsub.f32 %v136, %v1298
    %1300 = vmatprep.subr.mxu0 %v1299
    %v1301 = vand.u32 %v135, 4294901760
    %v1302 = vsub.f32 %v135, %v1301
    %1303 = vmatpush1.msra.mxu0 %v1302
    %v1304 = vand.u32 %v144, 4294901760
    %v1305 = vsub.f32 %v144, %v1304
    %1306 = vmatprep.subr.mxu0 %v1305
    %v1307 = vand.u32 %v143, 4294901760
    %v1308 = vsub.f32 %v143, %v1307
    %1309 = vmatpush1.msra.mxu0 %v1308
    %1310 = vmatprep.subr.mxu0 0.0
    %1311 = vmatpush1.msra.mxu0 0.0
    %1312 = vmatprep.subr.mxu0 0.0
    %1313 = vmatpush1.msra.mxu0 0.0
    %1314 = vmatprep.subr.mxu0 0.0
    %1315 = vmatpush1.msra.mxu0 0.0
    %1316 = vmatprep.subr.mxu0 0.0
    %1317 = vmatpush1.msra.mxu0 0.0
    %1318 = vmatprep.subr.mxu0 0.0
    %1319 = vmatpush1.msra.mxu0 0.0
    %1320 = vmatprep.subr.mxu0 0.0
    %1321 = vmatpush1.msra.mxu0 0.0
    %1322 = vmatprep.subr.mxu0 0.0
    %1323 = vmatpush1.msra.mxu0 0.0
    %1324 = vmatprep.subr.mxu0 0.0
    %1325 = vmatpush1.msra.mxu0 0.0
    %1326 = vmatprep.subr.mxu0 0.0
    %1327 = vmatpush1.msra.mxu0 0.0
    %1328 = vmatprep.subr.mxu0 0.0
    %1329 = vmatpush1.msra.mxu0 0.0
    %1330 = vmatprep.subr.mxu0 0.0
    %1331 = vmatpush1.msra.mxu0 0.0
    %1332 = vmatprep.subr.mxu0 0.0
    %1333 = vmatpush1.msra.mxu0 0.0
    %1334 = vmatprep.subr.mxu0 0.0
    %1335 = vmatpush1.msra.mxu0 0.0
    %1336 = vmatprep.subr.mxu0 0.0
    %1337 = vmatpush1.msra.mxu0 0.0
    %1338 = vmatprep.subr.mxu0 0.0
    %1339 = vmatpush1.msra.mxu0 0.0
    %1340 = vmatprep.subr.mxu0 0.0
    %1341 = vmatpush1.msra.mxu0 0.0
    %1342 = vmatprep.subr.mxu0 0.0
    %1343 = vmatpush1.msra.mxu0 0.0
    %1344 = vmatprep.subr.mxu0 0.0
    %1345 = vmatpush1.msra.mxu0 0.0
    %1346 = vmatprep.subr.mxu0 0.0
    %1347 = vmatpush1.msra.mxu0 0.0
    %1348 = vmatprep.subr.mxu0 0.0
    %1349 = vmatpush1.msra.mxu0 0.0
    %1350 = vmatprep.mubr.f32.mxu0 0.0
    %v1351 = vand.u32 %v193, 4294901760
    %v1352 = vsub.f32 %v193, %v1351
    %1353 = vmatmul.mubr.f32.gmra.mrb[0].mxu0 %v1352
    %v1354 = vpop.f32.mrb[0].mxu0
    %v1355 = vadd.f32 %v1234, %v1354
    %v1356 = vpop.f32.mrb[0].mxu0
    %v1357 = vadd.f32 %v1236, %v1356
    %1358 = vdwg.mxu0
    %v1359 = vand.u32 %v56, 4294901760
    %1360 = vmatprep.subr.mxu0 %v1359
    %v1361 = vand.u32 %v55, 4294901760
    %1362 = vmatpush1.msra.mxu0 %v1361
    %v1363 = vand.u32 %v64, 4294901760
    %1364 = vmatprep.subr.mxu0 %v1363
    %v1365 = vand.u32 %v63, 4294901760
    %1366 = vmatpush1.msra.mxu0 %v1365
    %v1367 = vand.u32 %v72, 4294901760
    %1368 = vmatprep.subr.mxu0 %v1367
    %v1369 = vand.u32 %v71, 4294901760
    %1370 = vmatpush1.msra.mxu0 %v1369
    %v1371 = vand.u32 %v80, 4294901760
    %1372 = vmatprep.subr.mxu0 %v1371
    %v1373 = vand.u32 %v79, 4294901760
    %1374 = vmatpush1.msra.mxu0 %v1373
    %v1375 = vand.u32 %v88, 4294901760
    %1376 = vmatprep.subr.mxu0 %v1375
    %v1377 = vand.u32 %v87, 4294901760
    %1378 = vmatpush1.msra.mxu0 %v1377
    %v1379 = vand.u32 %v96, 4294901760
    %1380 = vmatprep.subr.mxu0 %v1379
    %v1381 = vand.u32 %v95, 4294901760
    %1382 = vmatpush1.msra.mxu0 %v1381
    %v1383 = vand.u32 %v104, 4294901760
    %1384 = vmatprep.subr.mxu0 %v1383
    %v1385 = vand.u32 %v103, 4294901760
    %1386 = vmatpush1.msra.mxu0 %v1385
    %v1387 = vand.u32 %v112, 4294901760
    %1388 = vmatprep.subr.mxu0 %v1387
    %v1389 = vand.u32 %v111, 4294901760
    %1390 = vmatpush1.msra.mxu0 %v1389
    %v1391 = vand.u32 %v120, 4294901760
    %1392 = vmatprep.subr.mxu0 %v1391
    %v1393 = vand.u32 %v119, 4294901760
    %1394 = vmatpush1.msra.mxu0 %v1393
    %v1395 = vand.u32 %v128, 4294901760
    %1396 = vmatprep.subr.mxu0 %v1395
    %v1397 = vand.u32 %v127, 4294901760
    %1398 = vmatpush1.msra.mxu0 %v1397
    %v1399 = vand.u32 %v136, 4294901760
    %1400 = vmatprep.subr.mxu0 %v1399
    %v1401 = vand.u32 %v135, 4294901760
    %1402 = vmatpush1.msra.mxu0 %v1401
    %v1403 = vand.u32 %v144, 4294901760
    %1404 = vmatprep.subr.mxu0 %v1403
    %v1405 = vand.u32 %v143, 4294901760
    %1406 = vmatpush1.msra.mxu0 %v1405
    %1407 = vmatprep.subr.mxu0 0.0
    %1408 = vmatpush1.msra.mxu0 0.0
    %1409 = vmatprep.subr.mxu0 0.0
    %1410 = vmatpush1.msra.mxu0 0.0
    %1411 = vmatprep.subr.mxu0 0.0
    %1412 = vmatpush1.msra.mxu0 0.0
    %1413 = vmatprep.subr.mxu0 0.0
    %1414 = vmatpush1.msra.mxu0 0.0
    %1415 = vmatprep.subr.mxu0 0.0
    %1416 = vmatpush1.msra.mxu0 0.0
    %1417 = vmatprep.subr.mxu0 0.0
    %1418 = vmatpush1.msra.mxu0 0.0
    %1419 = vmatprep.subr.mxu0 0.0
    %1420 = vmatpush1.msra.mxu0 0.0
    %1421 = vmatprep.subr.mxu0 0.0
    %1422 = vmatpush1.msra.mxu0 0.0
    %1423 = vmatprep.subr.mxu0 0.0
    %1424 = vmatpush1.msra.mxu0 0.0
    %1425 = vmatprep.subr.mxu0 0.0
    %1426 = vmatpush1.msra.mxu0 0.0
    %1427 = vmatprep.subr.mxu0 0.0
    %1428 = vmatpush1.msra.mxu0 0.0
    %1429 = vmatprep.subr.mxu0 0.0
    %1430 = vmatpush1.msra.mxu0 0.0
    %1431 = vmatprep.subr.mxu0 0.0
    %1432 = vmatpush1.msra.mxu0 0.0
    %1433 = vmatprep.subr.mxu0 0.0
    %1434 = vmatpush1.msra.mxu0 0.0
    %1435 = vmatprep.subr.mxu0 0.0
    %1436 = vmatpush1.msra.mxu0 0.0
    %1437 = vmatprep.subr.mxu0 0.0
    %1438 = vmatpush1.msra.mxu0 0.0
    %1439 = vmatprep.subr.mxu0 0.0
    %1440 = vmatpush1.msra.mxu0 0.0
    %1441 = vmatprep.subr.mxu0 0.0
    %1442 = vmatpush1.msra.mxu0 0.0
    %1443 = vmatprep.subr.mxu0 0.0
    %1444 = vmatpush1.msra.mxu0 0.0
    %1445 = vmatprep.subr.mxu0 0.0
    %1446 = vmatpush1.msra.mxu0 0.0
    %1447 = vmatprep.mubr.f32.mxu0 0.0
    %v1448 = vand.u32 %v193, 4294901760
    %v1449 = vsub.f32 %v193, %v1448
    %v1450 = vand.u32 %v1449, 4294901760
    %1451 = vmatmul.mubr.f32.gmra.mrb[0].mxu0 %v1450
    %v1452 = vpop.f32.mrb[0].mxu0
    %v1453 = vadd.f32 %v1355, %v1452
    %v1454 = vpop.f32.mrb[0].mxu0
    %v1455 = vadd.f32 %v1357, %v1454
    %1456 = vdwg.mxu0
    %v1457 = vand.u32 %v56, 4294901760
    %v1458 = vsub.f32 %v56, %v1457
    %v1459 = vand.u32 %v1458, 4294901760
    %1460 = vmatprep.subr.mxu0 %v1459
    %v1461 = vand.u32 %v55, 4294901760
    %v1462 = vsub.f32 %v55, %v1461
    %v1463 = vand.u32 %v1462, 4294901760
    %1464 = vmatpush1.msra.mxu0 %v1463
    %v1465 = vand.u32 %v64, 4294901760
    %v1466 = vsub.f32 %v64, %v1465
    %v1467 = vand.u32 %v1466, 4294901760
    %1468 = vmatprep.subr.mxu0 %v1467
    %v1469 = vand.u32 %v63, 4294901760
    %v1470 = vsub.f32 %v63, %v1469
    %v1471 = vand.u32 %v1470, 4294901760
    %1472 = vmatpush1.msra.mxu0 %v1471
    %v1473 = vand.u32 %v72, 4294901760
    %v1474 = vsub.f32 %v72, %v1473
    %v1475 = vand.u32 %v1474, 4294901760
    %1476 = vmatprep.subr.mxu0 %v1475
    %v1477 = vand.u32 %v71, 4294901760
    %v1478 = vsub.f32 %v71, %v1477
    %v1479 = vand.u32 %v1478, 4294901760
    %1480 = vmatpush1.msra.mxu0 %v1479
    %v1481 = vand.u32 %v80, 4294901760
    %v1482 = vsub.f32 %v80, %v1481
    %v1483 = vand.u32 %v1482, 4294901760
    %1484 = vmatprep.subr.mxu0 %v1483
    %v1485 = vand.u32 %v79, 4294901760
    %v1486 = vsub.f32 %v79, %v1485
    %v1487 = vand.u32 %v1486, 4294901760
    %1488 = vmatpush1.msra.mxu0 %v1487
    %v1489 = vand.u32 %v88, 4294901760
    %v1490 = vsub.f32 %v88, %v1489
    %v1491 = vand.u32 %v1490, 4294901760
    %1492 = vmatprep.subr.mxu0 %v1491
    %v1493 = vand.u32 %v87, 4294901760
    %v1494 = vsub.f32 %v87, %v1493
    %v1495 = vand.u32 %v1494, 4294901760
    %1496 = vmatpush1.msra.mxu0 %v1495
    %v1497 = vand.u32 %v96, 4294901760
    %v1498 = vsub.f32 %v96, %v1497
    %v1499 = vand.u32 %v1498, 4294901760
    %1500 = vmatprep.subr.mxu0 %v1499
    %v1501 = vand.u32 %v95, 4294901760
    %v1502 = vsub.f32 %v95, %v1501
    %v1503 = vand.u32 %v1502, 4294901760
    %1504 = vmatpush1.msra.mxu0 %v1503
    %v1505 = vand.u32 %v104, 4294901760
    %v1506 = vsub.f32 %v104, %v1505
    %v1507 = vand.u32 %v1506, 4294901760
    %1508 = vmatprep.subr.mxu0 %v1507
    %v1509 = vand.u32 %v103, 4294901760
    %v1510 = vsub.f32 %v103, %v1509
    %v1511 = vand.u32 %v1510, 4294901760
    %1512 = vmatpush1.msra.mxu0 %v1511
    %v1513 = vand.u32 %v112, 4294901760
    %v1514 = vsub.f32 %v112, %v1513
    %v1515 = vand.u32 %v1514, 4294901760
    %1516 = vmatprep.subr.mxu0 %v1515
    %v1517 = vand.u32 %v111, 4294901760
    %v1518 = vsub.f32 %v111, %v1517
    %v1519 = vand.u32 %v1518, 4294901760
    %1520 = vmatpush1.msra.mxu0 %v1519
    %v1521 = vand.u32 %v120, 4294901760
    %v1522 = vsub.f32 %v120, %v1521
    %v1523 = vand.u32 %v1522, 4294901760
    %1524 = vmatprep.subr.mxu0 %v1523
    %v1525 = vand.u32 %v119, 4294901760
    %v1526 = vsub.f32 %v119, %v1525
    %v1527 = vand.u32 %v1526, 4294901760
    %1528 = vmatpush1.msra.mxu0 %v1527
    %v1529 = vand.u32 %v128, 4294901760
    %v1530 = vsub.f32 %v128, %v1529
    %v1531 = vand.u32 %v1530, 4294901760
    %1532 = vmatprep.subr.mxu0 %v1531
    %v1533 = vand.u32 %v127, 4294901760
    %v1534 = vsub.f32 %v127, %v1533
    %v1535 = vand.u32 %v1534, 4294901760
    %1536 = vmatpush1.msra.mxu0 %v1535
    %v1537 = vand.u32 %v136, 4294901760
    %v1538 = vsub.f32 %v136, %v1537
    %v1539 = vand.u32 %v1538, 4294901760
    %1540 = vmatprep.subr.mxu0 %v1539
    %v1541 = vand.u32 %v135, 4294901760
    %v1542 = vsub.f32 %v135, %v1541
    %v1543 = vand.u32 %v1542, 4294901760
    %1544 = vmatpush1.msra.mxu0 %v1543
    %v1545 = vand.u32 %v144, 4294901760
    %v1546 = vsub.f32 %v144, %v1545
    %v1547 = vand.u32 %v1546, 4294901760
    %1548 = vmatprep.subr.mxu0 %v1547
    %v1549 = vand.u32 %v143, 4294901760
    %v1550 = vsub.f32 %v143, %v1549
    %v1551 = vand.u32 %v1550, 4294901760
    %1552 = vmatpush1.msra.mxu0 %v1551
    %1553 = vmatprep.subr.mxu0 0.0
    %1554 = vmatpush1.msra.mxu0 0.0
    %1555 = vmatprep.subr.mxu0 0.0
    %1556 = vmatpush1.msra.mxu0 0.0
    %1557 = vmatprep.subr.mxu0 0.0
    %1558 = vmatpush1.msra.mxu0 0.0
    %1559 = vmatprep.subr.mxu0 0.0
    %1560 = vmatpush1.msra.mxu0 0.0
    %1561 = vmatprep.subr.mxu0 0.0
    %1562 = vmatpush1.msra.mxu0 0.0
    %1563 = vmatprep.subr.mxu0 0.0
    %1564 = vmatpush1.msra.mxu0 0.0
    %1565 = vmatprep.subr.mxu0 0.0
    %1566 = vmatpush1.msra.mxu0 0.0
    %1567 = vmatprep.subr.mxu0 0.0
    %1568 = vmatpush1.msra.mxu0 0.0
    %1569 = vmatprep.subr.mxu0 0.0
    %1570 = vmatpush1.msra.mxu0 0.0
    %1571 = vmatprep.subr.mxu0 0.0
    %1572 = vmatpush1.msra.mxu0 0.0
    %1573 = vmatprep.subr.mxu0 0.0
    %1574 = vmatpush1.msra.mxu0 0.0
    %1575 = vmatprep.subr.mxu0 0.0
    %1576 = vmatpush1.msra.mxu0 0.0
    %1577 = vmatprep.subr.mxu0 0.0
    %1578 = vmatpush1.msra.mxu0 0.0
    %1579 = vmatprep.subr.mxu0 0.0
    %1580 = vmatpush1.msra.mxu0 0.0
    %1581 = vmatprep.subr.mxu0 0.0
    %1582 = vmatpush1.msra.mxu0 0.0
    %1583 = vmatprep.subr.mxu0 0.0
    %1584 = vmatpush1.msra.mxu0 0.0
    %1585 = vmatprep.subr.mxu0 0.0
    %1586 = vmatpush1.msra.mxu0 0.0
    %1587 = vmatprep.subr.mxu0 0.0
    %1588 = vmatpush1.msra.mxu0 0.0
    %1589 = vmatprep.subr.mxu0 0.0
    %1590 = vmatpush1.msra.mxu0 0.0
    %1591 = vmatprep.subr.mxu0 0.0
    %1592 = vmatpush1.msra.mxu0 0.0
    %1593 = vmatprep.mubr.f32.mxu0 0.0
    %v1594 = vand.u32 %v193, 4294901760
    %1595 = vmatmul.mubr.f32.gmra.mrb[0].mxu0 %v1594
    %v1596 = vpop.f32.mrb[0].mxu0
    %v1597 = vadd.f32 %v1453, %v1596
    %v1598 = vpop.f32.mrb[0].mxu0
    %v1599 = vadd.f32 %v1455, %v1598
    %1600 = vdwg.mxu0
    %v1601 = vand.u32 %v56, 4294901760
    %1602 = vmatprep.subr.mxu0 %v1601
    %v1603 = vand.u32 %v55, 4294901760
    %1604 = vmatpush1.msra.mxu0 %v1603
    %v1605 = vand.u32 %v64, 4294901760
    %1606 = vmatprep.subr.mxu0 %v1605
    %v1607 = vand.u32 %v63, 4294901760
    %1608 = vmatpush1.msra.mxu0 %v1607
    %v1609 = vand.u32 %v72, 4294901760
    %1610 = vmatprep.subr.mxu0 %v1609
    %v1611 = vand.u32 %v71, 4294901760
    %1612 = vmatpush1.msra.mxu0 %v1611
    %v1613 = vand.u32 %v80, 4294901760
    %1614 = vmatprep.subr.mxu0 %v1613
    %v1615 = vand.u32 %v79, 4294901760
    %1616 = vmatpush1.msra.mxu0 %v1615
    %v1617 = vand.u32 %v88, 4294901760
    %1618 = vmatprep.subr.mxu0 %v1617
    %v1619 = vand.u32 %v87, 4294901760
    %1620 = vmatpush1.msra.mxu0 %v1619
    %v1621 = vand.u32 %v96, 4294901760
    %1622 = vmatprep.subr.mxu0 %v1621
    %v1623 = vand.u32 %v95, 4294901760
    %1624 = vmatpush1.msra.mxu0 %v1623
    %v1625 = vand.u32 %v104, 4294901760
    %1626 = vmatprep.subr.mxu0 %v1625
    %v1627 = vand.u32 %v103, 4294901760
    %1628 = vmatpush1.msra.mxu0 %v1627
    %v1629 = vand.u32 %v112, 4294901760
    %1630 = vmatprep.subr.mxu0 %v1629
    %v1631 = vand.u32 %v111, 4294901760
    %1632 = vmatpush1.msra.mxu0 %v1631
    %v1633 = vand.u32 %v120, 4294901760
    %1634 = vmatprep.subr.mxu0 %v1633
    %v1635 = vand.u32 %v119, 4294901760
    %1636 = vmatpush1.msra.mxu0 %v1635
    %v1637 = vand.u32 %v128, 4294901760
    %1638 = vmatprep.subr.mxu0 %v1637
    %v1639 = vand.u32 %v127, 4294901760
    %1640 = vmatpush1.msra.mxu0 %v1639
    %v1641 = vand.u32 %v136, 4294901760
    %1642 = vmatprep.subr.mxu0 %v1641
    %v1643 = vand.u32 %v135, 4294901760
    %1644 = vmatpush1.msra.mxu0 %v1643
    %v1645 = vand.u32 %v144, 4294901760
    %1646 = vmatprep.subr.mxu0 %v1645
    %v1647 = vand.u32 %v143, 4294901760
    %1648 = vmatpush1.msra.mxu0 %v1647
    %1649 = vmatprep.subr.mxu0 0.0
    %1650 = vmatpush1.msra.mxu0 0.0
    %1651 = vmatprep.subr.mxu0 0.0
    %1652 = vmatpush1.msra.mxu0 0.0
    %1653 = vmatprep.subr.mxu0 0.0
    %1654 = vmatpush1.msra.mxu0 0.0
    %1655 = vmatprep.subr.mxu0 0.0
    %1656 = vmatpush1.msra.mxu0 0.0
    %1657 = vmatprep.subr.mxu0 0.0
    %1658 = vmatpush1.msra.mxu0 0.0
    %1659 = vmatprep.subr.mxu0 0.0
    %1660 = vmatpush1.msra.mxu0 0.0
    %1661 = vmatprep.subr.mxu0 0.0
    %1662 = vmatpush1.msra.mxu0 0.0
    %1663 = vmatprep.subr.mxu0 0.0
    %1664 = vmatpush1.msra.mxu0 0.0
    %1665 = vmatprep.subr.mxu0 0.0
    %1666 = vmatpush1.msra.mxu0 0.0
    %1667 = vmatprep.subr.mxu0 0.0
    %1668 = vmatpush1.msra.mxu0 0.0
    %1669 = vmatprep.subr.mxu0 0.0
    %1670 = vmatpush1.msra.mxu0 0.0
    %1671 = vmatprep.subr.mxu0 0.0
    %1672 = vmatpush1.msra.mxu0 0.0
    %1673 = vmatprep.subr.mxu0 0.0
    %1674 = vmatpush1.msra.mxu0 0.0
    %1675 = vmatprep.subr.mxu0 0.0
    %1676 = vmatpush1.msra.mxu0 0.0
    %1677 = vmatprep.subr.mxu0 0.0
    %1678 = vmatpush1.msra.mxu0 0.0
    %1679 = vmatprep.subr.mxu0 0.0
    %1680 = vmatpush1.msra.mxu0 0.0
    %1681 = vmatprep.subr.mxu0 0.0
    %1682 = vmatpush1.msra.mxu0 0.0
    %1683 = vmatprep.subr.mxu0 0.0
    %1684 = vmatpush1.msra.mxu0 0.0
    %1685 = vmatprep.subr.mxu0 0.0
    %1686 = vmatpush1.msra.mxu0 0.0
    %1687 = vmatprep.subr.mxu0 0.0
    %1688 = vmatpush1.msra.mxu0 0.0
    %1689 = vmatprep.mubr.f32.mxu0 0.0
    %v1690 = vand.u32 %v193, 4294901760
    %1691 = vmatmul.mubr.f32.gmra.mrb[0].mxu0 %v1690
    %v1692 = vpop.f32.mrb[0].mxu0
    %v1693 = vadd.f32 %v1597, %v1692
    %v1694 = vpop.f32.mrb[0].mxu0
    %v1695 = vadd.f32 %v1599, %v1694
    %1696 = vdwg.mxu0
    %v1697 = vand.u32 %v58, 4294901760
    %1698 = vmatprep.subr.mxu0 %v1697
    %v1699 = vand.u32 %v57, 4294901760
    %1700 = vmatpush1.msra.mxu0 %v1699
    %v1701 = vand.u32 %v66, 4294901760
    %1702 = vmatprep.subr.mxu0 %v1701
    %v1703 = vand.u32 %v65, 4294901760
    %1704 = vmatpush1.msra.mxu0 %v1703
    %v1705 = vand.u32 %v74, 4294901760
    %1706 = vmatprep.subr.mxu0 %v1705
    %v1707 = vand.u32 %v73, 4294901760
    %1708 = vmatpush1.msra.mxu0 %v1707
    %v1709 = vand.u32 %v82, 4294901760
    %1710 = vmatprep.subr.mxu0 %v1709
    %v1711 = vand.u32 %v81, 4294901760
    %1712 = vmatpush1.msra.mxu0 %v1711
    %v1713 = vand.u32 %v90, 4294901760
    %1714 = vmatprep.subr.mxu0 %v1713
    %v1715 = vand.u32 %v89, 4294901760
    %1716 = vmatpush1.msra.mxu0 %v1715
    %v1717 = vand.u32 %v98, 4294901760
    %1718 = vmatprep.subr.mxu0 %v1717
    %v1719 = vand.u32 %v97, 4294901760
    %1720 = vmatpush1.msra.mxu0 %v1719
    %v1721 = vand.u32 %v106, 4294901760
    %1722 = vmatprep.subr.mxu0 %v1721
    %v1723 = vand.u32 %v105, 4294901760
    %1724 = vmatpush1.msra.mxu0 %v1723
    %v1725 = vand.u32 %v114, 4294901760
    %1726 = vmatprep.subr.mxu0 %v1725
    %v1727 = vand.u32 %v113, 4294901760
    %1728 = vmatpush1.msra.mxu0 %v1727
    %v1729 = vand.u32 %v122, 4294901760
    %1730 = vmatprep.subr.mxu0 %v1729
    %v1731 = vand.u32 %v121, 4294901760
    %1732 = vmatpush1.msra.mxu0 %v1731
    %v1733 = vand.u32 %v130, 4294901760
    %1734 = vmatprep.subr.mxu0 %v1733
    %v1735 = vand.u32 %v129, 4294901760
    %1736 = vmatpush1.msra.mxu0 %v1735
    %v1737 = vand.u32 %v138, 4294901760
    %1738 = vmatprep.subr.mxu0 %v1737
    %v1739 = vand.u32 %v137, 4294901760
    %1740 = vmatpush1.msra.mxu0 %v1739
    %v1741 = vand.u32 %v146, 4294901760
    %1742 = vmatprep.subr.mxu0 %v1741
    %v1743 = vand.u32 %v145, 4294901760
    %1744 = vmatpush1.msra.mxu0 %v1743
    %1745 = vmatprep.subr.mxu0 0.0
    %1746 = vmatpush1.msra.mxu0 0.0
    %1747 = vmatprep.subr.mxu0 0.0
    %1748 = vmatpush1.msra.mxu0 0.0
    %1749 = vmatprep.subr.mxu0 0.0
    %1750 = vmatpush1.msra.mxu0 0.0
    %1751 = vmatprep.subr.mxu0 0.0
    %1752 = vmatpush1.msra.mxu0 0.0
    %1753 = vmatprep.subr.mxu0 0.0
    %1754 = vmatpush1.msra.mxu0 0.0
    %1755 = vmatprep.subr.mxu0 0.0
    %1756 = vmatpush1.msra.mxu0 0.0
    %1757 = vmatprep.subr.mxu0 0.0
    %1758 = vmatpush1.msra.mxu0 0.0
    %1759 = vmatprep.subr.mxu0 0.0
    %1760 = vmatpush1.msra.mxu0 0.0
    %1761 = vmatprep.subr.mxu0 0.0
    %1762 = vmatpush1.msra.mxu0 0.0
    %1763 = vmatprep.subr.mxu0 0.0
    %1764 = vmatpush1.msra.mxu0 0.0
    %1765 = vmatprep.subr.mxu0 0.0
    %1766 = vmatpush1.msra.mxu0 0.0
    %1767 = vmatprep.subr.mxu0 0.0
    %1768 = vmatpush1.msra.mxu0 0.0
    %1769 = vmatprep.subr.mxu0 0.0
    %1770 = vmatpush1.msra.mxu0 0.0
    %1771 = vmatprep.subr.mxu0 0.0
    %1772 = vmatpush1.msra.mxu0 0.0
    %1773 = vmatprep.subr.mxu0 0.0
    %1774 = vmatpush1.msra.mxu0 0.0
    %1775 = vmatprep.subr.mxu0 0.0
    %1776 = vmatpush1.msra.mxu0 0.0
    %1777 = vmatprep.subr.mxu0 0.0
    %1778 = vmatpush1.msra.mxu0 0.0
    %1779 = vmatprep.subr.mxu0 0.0
    %1780 = vmatpush1.msra.mxu0 0.0
    %1781 = vmatprep.subr.mxu0 0.0
    %1782 = vmatpush1.msra.mxu0 0.0
    %1783 = vmatprep.subr.mxu0 0.0
    %1784 = vmatpush1.msra.mxu0 0.0
    %1785 = vmatprep.mubr.f32.mxu0 0.0
    %v1786 = vand.u32 %v193, 4294901760
    %v1787 = vsub.f32 %v193, %v1786
    %v1788 = vand.u32 %v1787, 4294901760
    %v1789 = vsub.f32 %v1787, %v1788
    %v1790 = vand.u32 %v1789, 4294901760
    %1791 = vmatmul.mubr.f32.gmra.mrb[0].mxu0 %v1790
    %v1792 = vpop.f32.mrb[0].mxu0
    %v1793 = vadd.f32 %v170, %v1792
    %v1794 = vpop.f32.mrb[0].mxu0
    %v1795 = vadd.f32 %v174, %v1794
    %1796 = vdwg.mxu0
    %v1797 = vand.u32 %v58, 4294901760
    %v1798 = vsub.f32 %v58, %v1797
    %v1799 = vand.u32 %v1798, 4294901760
    %v1800 = vsub.f32 %v1798, %v1799
    %v1801 = vand.u32 %v1800, 4294901760
    %1802 = vmatprep.subr.mxu0 %v1801
    %v1803 = vand.u32 %v57, 4294901760
    %v1804 = vsub.f32 %v57, %v1803
    %v1805 = vand.u32 %v1804, 4294901760
    %v1806 = vsub.f32 %v1804, %v1805
    %v1807 = vand.u32 %v1806, 4294901760
    %1808 = vmatpush1.msra.mxu0 %v1807
    %v1809 = vand.u32 %v66, 4294901760
    %v1810 = vsub.f32 %v66, %v1809
    %v1811 = vand.u32 %v1810, 4294901760
    %v1812 = vsub.f32 %v1810, %v1811
    %v1813 = vand.u32 %v1812, 4294901760
    %1814 = vmatprep.subr.mxu0 %v1813
    %v1815 = vand.u32 %v65, 4294901760
    %v1816 = vsub.f32 %v65, %v1815
    %v1817 = vand.u32 %v1816, 4294901760
    %v1818 = vsub.f32 %v1816, %v1817
    %v1819 = vand.u32 %v1818, 4294901760
    %1820 = vmatpush1.msra.mxu0 %v1819
    %v1821 = vand.u32 %v74, 4294901760
    %v1822 = vsub.f32 %v74, %v1821
    %v1823 = vand.u32 %v1822, 4294901760
    %v1824 = vsub.f32 %v1822, %v1823
    %v1825 = vand.u32 %v1824, 4294901760
    %1826 = vmatprep.subr.mxu0 %v1825
    %v1827 = vand.u32 %v73, 4294901760
    %v1828 = vsub.f32 %v73, %v1827
    %v1829 = vand.u32 %v1828, 4294901760
    %v1830 = vsub.f32 %v1828, %v1829
    %v1831 = vand.u32 %v1830, 4294901760
    %1832 = vmatpush1.msra.mxu0 %v1831
    %v1833 = vand.u32 %v82, 4294901760
    %v1834 = vsub.f32 %v82, %v1833
    %v1835 = vand.u32 %v1834, 4294901760
    %v1836 = vsub.f32 %v1834, %v1835
    %v1837 = vand.u32 %v1836, 4294901760
    %1838 = vmatprep.subr.mxu0 %v1837
    %v1839 = vand.u32 %v81, 4294901760
    %v1840 = vsub.f32 %v81, %v1839
    %v1841 = vand.u32 %v1840, 4294901760
    %v1842 = vsub.f32 %v1840, %v1841
    %v1843 = vand.u32 %v1842, 4294901760
    %1844 = vmatpush1.msra.mxu0 %v1843
    %v1845 = vand.u32 %v90, 4294901760
    %v1846 = vsub.f32 %v90, %v1845
    %v1847 = vand.u32 %v1846, 4294901760
    %v1848 = vsub.f32 %v1846, %v1847
    %v1849 = vand.u32 %v1848, 4294901760
    %1850 = vmatprep.subr.mxu0 %v1849
    %v1851 = vand.u32 %v89, 4294901760
    %v1852 = vsub.f32 %v89, %v1851
    %v1853 = vand.u32 %v1852, 4294901760
    %v1854 = vsub.f32 %v1852, %v1853
    %v1855 = vand.u32 %v1854, 4294901760
    %1856 = vmatpush1.msra.mxu0 %v1855
    %v1857 = vand.u32 %v98, 4294901760
    %v1858 = vsub.f32 %v98, %v1857
    %v1859 = vand.u32 %v1858, 4294901760
    %v1860 = vsub.f32 %v1858, %v1859
    %v1861 = vand.u32 %v1860, 4294901760
    %1862 = vmatprep.subr.mxu0 %v1861
    %v1863 = vand.u32 %v97, 4294901760
    %v1864 = vsub.f32 %v97, %v1863
    %v1865 = vand.u32 %v1864, 4294901760
    %v1866 = vsub.f32 %v1864, %v1865
    %v1867 = vand.u32 %v1866, 4294901760
    %1868 = vmatpush1.msra.mxu0 %v1867
    %v1869 = vand.u32 %v106, 4294901760
    %v1870 = vsub.f32 %v106, %v1869
    %v1871 = vand.u32 %v1870, 4294901760
    %v1872 = vsub.f32 %v1870, %v1871
    %v1873 = vand.u32 %v1872, 4294901760
    %1874 = vmatprep.subr.mxu0 %v1873
    %v1875 = vand.u32 %v105, 4294901760
    %v1876 = vsub.f32 %v105, %v1875
    %v1877 = vand.u32 %v1876, 4294901760
    %v1878 = vsub.f32 %v1876, %v1877
    %v1879 = vand.u32 %v1878, 4294901760
    %1880 = vmatpush1.msra.mxu0 %v1879
    %v1881 = vand.u32 %v114, 4294901760
    %v1882 = vsub.f32 %v114, %v1881
    %v1883 = vand.u32 %v1882, 4294901760
    %v1884 = vsub.f32 %v1882, %v1883
    %v1885 = vand.u32 %v1884, 4294901760
    %1886 = vmatprep.subr.mxu0 %v1885
    %v1887 = vand.u32 %v113, 4294901760
    %v1888 = vsub.f32 %v113, %v1887
    %v1889 = vand.u32 %v1888, 4294901760
    %v1890 = vsub.f32 %v1888, %v1889
    %v1891 = vand.u32 %v1890, 4294901760
    %1892 = vmatpush1.msra.mxu0 %v1891
    %v1893 = vand.u32 %v122, 4294901760
    %v1894 = vsub.f32 %v122, %v1893
    %v1895 = vand.u32 %v1894, 4294901760
    %v1896 = vsub.f32 %v1894, %v1895
    %v1897 = vand.u32 %v1896, 4294901760
    %1898 = vmatprep.subr.mxu0 %v1897
    %v1899 = vand.u32 %v121, 4294901760
    %v1900 = vsub.f32 %v121, %v1899
    %v1901 = vand.u32 %v1900, 4294901760
    %v1902 = vsub.f32 %v1900, %v1901
    %v1903 = vand.u32 %v1902, 4294901760
    %1904 = vmatpush1.msra.mxu0 %v1903
    %v1905 = vand.u32 %v130, 4294901760
    %v1906 = vsub.f32 %v130, %v1905
    %v1907 = vand.u32 %v1906, 4294901760
    %v1908 = vsub.f32 %v1906, %v1907
    %v1909 = vand.u32 %v1908, 4294901760
    %1910 = vmatprep.subr.mxu0 %v1909
    %v1911 = vand.u32 %v129, 4294901760
    %v1912 = vsub.f32 %v129, %v1911
    %v1913 = vand.u32 %v1912, 4294901760
    %v1914 = vsub.f32 %v1912, %v1913
    %v1915 = vand.u32 %v1914, 4294901760
    %1916 = vmatpush1.msra.mxu0 %v1915
    %v1917 = vand.u32 %v138, 4294901760
    %v1918 = vsub.f32 %v138, %v1917
    %v1919 = vand.u32 %v1918, 4294901760
    %v1920 = vsub.f32 %v1918, %v1919
    %v1921 = vand.u32 %v1920, 4294901760
    %1922 = vmatprep.subr.mxu0 %v1921
    %v1923 = vand.u32 %v137, 4294901760
    %v1924 = vsub.f32 %v137, %v1923
    %v1925 = vand.u32 %v1924, 4294901760
    %v1926 = vsub.f32 %v1924, %v1925
    %v1927 = vand.u32 %v1926, 4294901760
    %1928 = vmatpush1.msra.mxu0 %v1927
    %v1929 = vand.u32 %v146, 4294901760
    %v1930 = vsub.f32 %v146, %v1929
    %v1931 = vand.u32 %v1930, 4294901760
    %v1932 = vsub.f32 %v1930, %v1931
    %v1933 = vand.u32 %v1932, 4294901760
    %1934 = vmatprep.subr.mxu0 %v1933
    %v1935 = vand.u32 %v145, 4294901760
    %v1936 = vsub.f32 %v145, %v1935
    %v1937 = vand.u32 %v1936, 4294901760
    %v1938 = vsub.f32 %v1936, %v1937
    %v1939 = vand.u32 %v1938, 4294901760
    %1940 = vmatpush1.msra.mxu0 %v1939
    %1941 = vmatprep.subr.mxu0 0.0
    %1942 = vmatpush1.msra.mxu0 0.0
    %1943 = vmatprep.subr.mxu0 0.0
    %1944 = vmatpush1.msra.mxu0 0.0
    %1945 = vmatprep.subr.mxu0 0.0
    %1946 = vmatpush1.msra.mxu0 0.0
    %1947 = vmatprep.subr.mxu0 0.0
    %1948 = vmatpush1.msra.mxu0 0.0
    %1949 = vmatprep.subr.mxu0 0.0
    %1950 = vmatpush1.msra.mxu0 0.0
    %1951 = vmatprep.subr.mxu0 0.0
    %1952 = vmatpush1.msra.mxu0 0.0
    %1953 = vmatprep.subr.mxu0 0.0
    %1954 = vmatpush1.msra.mxu0 0.0
    %1955 = vmatprep.subr.mxu0 0.0
    %1956 = vmatpush1.msra.mxu0 0.0
    %1957 = vmatprep.subr.mxu0 0.0
    %1958 = vmatpush1.msra.mxu0 0.0
    %1959 = vmatprep.subr.mxu0 0.0
    %1960 = vmatpush1.msra.mxu0 0.0
    %1961 = vmatprep.subr.mxu0 0.0
    %1962 = vmatpush1.msra.mxu0 0.0
    %1963 = vmatprep.subr.mxu0 0.0
    %1964 = vmatpush1.msra.mxu0 0.0
    %1965 = vmatprep.subr.mxu0 0.0
    %1966 = vmatpush1.msra.mxu0 0.0
    %1967 = vmatprep.subr.mxu0 0.0
    %1968 = vmatpush1.msra.mxu0 0.0
    %1969 = vmatprep.subr.mxu0 0.0
    %1970 = vmatpush1.msra.mxu0 0.0
    %1971 = vmatprep.subr.mxu0 0.0
    %1972 = vmatpush1.msra.mxu0 0.0
    %1973 = vmatprep.subr.mxu0 0.0
    %1974 = vmatpush1.msra.mxu0 0.0
    %1975 = vmatprep.subr.mxu0 0.0
    %1976 = vmatpush1.msra.mxu0 0.0
    %1977 = vmatprep.subr.mxu0 0.0
    %1978 = vmatpush1.msra.mxu0 0.0
    %1979 = vmatprep.subr.mxu0 0.0
    %1980 = vmatpush1.msra.mxu0 0.0
    %1981 = vmatprep.mubr.f32.mxu0 0.0
    %v1982 = vand.u32 %v193, 4294901760
    %1983 = vmatmul.mubr.f32.gmra.mrb[0].mxu0 %v1982
    %v1984 = vpop.f32.mrb[0].mxu0
    %v1985 = vadd.f32 %v1793, %v1984
    %v1986 = vpop.f32.mrb[0].mxu0
    %v1987 = vadd.f32 %v1795, %v1986
    %1988 = vdwg.mxu0
    %v1989 = vand.u32 %v58, 4294901760
    %v1990 = vsub.f32 %v58, %v1989
    %1991 = vmatprep.subr.mxu0 %v1990
    %v1992 = vand.u32 %v57, 4294901760
    %v1993 = vsub.f32 %v57, %v1992
    %1994 = vmatpush1.msra.mxu0 %v1993
    %v1995 = vand.u32 %v66, 4294901760
    %v1996 = vsub.f32 %v66, %v1995
    %1997 = vmatprep.subr.mxu0 %v1996
    %v1998 = vand.u32 %v65, 4294901760
    %v1999 = vsub.f32 %v65, %v1998
    %2000 = vmatpush1.msra.mxu0 %v1999
    %v2001 = vand.u32 %v74, 4294901760
    %v2002 = vsub.f32 %v74, %v2001
    %2003 = vmatprep.subr.mxu0 %v2002
    %v2004 = vand.u32 %v73, 4294901760
    %v2005 = vsub.f32 %v73, %v2004
    %2006 = vmatpush1.msra.mxu0 %v2005
    %v2007 = vand.u32 %v82, 4294901760
    %v2008 = vsub.f32 %v82, %v2007
    %2009 = vmatprep.subr.mxu0 %v2008
    %v2010 = vand.u32 %v81, 4294901760
    %v2011 = vsub.f32 %v81, %v2010
    %2012 = vmatpush1.msra.mxu0 %v2011
    %v2013 = vand.u32 %v90, 4294901760
    %v2014 = vsub.f32 %v90, %v2013
    %2015 = vmatprep.subr.mxu0 %v2014
    %v2016 = vand.u32 %v89, 4294901760
    %v2017 = vsub.f32 %v89, %v2016
    %2018 = vmatpush1.msra.mxu0 %v2017
    %v2019 = vand.u32 %v98, 4294901760
    %v2020 = vsub.f32 %v98, %v2019
    %2021 = vmatprep.subr.mxu0 %v2020
    %v2022 = vand.u32 %v97, 4294901760
    %v2023 = vsub.f32 %v97, %v2022
    %2024 = vmatpush1.msra.mxu0 %v2023
    %v2025 = vand.u32 %v106, 4294901760
    %v2026 = vsub.f32 %v106, %v2025
    %2027 = vmatprep.subr.mxu0 %v2026
    %v2028 = vand.u32 %v105, 4294901760
    %v2029 = vsub.f32 %v105, %v2028
    %2030 = vmatpush1.msra.mxu0 %v2029
    %v2031 = vand.u32 %v114, 4294901760
    %v2032 = vsub.f32 %v114, %v2031
    %2033 = vmatprep.subr.mxu0 %v2032
    %v2034 = vand.u32 %v113, 4294901760
    %v2035 = vsub.f32 %v113, %v2034
    %2036 = vmatpush1.msra.mxu0 %v2035
    %v2037 = vand.u32 %v122, 4294901760
    %v2038 = vsub.f32 %v122, %v2037
    %2039 = vmatprep.subr.mxu0 %v2038
    %v2040 = vand.u32 %v121, 4294901760
    %v2041 = vsub.f32 %v121, %v2040
    %2042 = vmatpush1.msra.mxu0 %v2041
    %v2043 = vand.u32 %v130, 4294901760
    %v2044 = vsub.f32 %v130, %v2043
    %2045 = vmatprep.subr.mxu0 %v2044
    %v2046 = vand.u32 %v129, 4294901760
    %v2047 = vsub.f32 %v129, %v2046
    %2048 = vmatpush1.msra.mxu0 %v2047
    %v2049 = vand.u32 %v138, 4294901760
    %v2050 = vsub.f32 %v138, %v2049
    %2051 = vmatprep.subr.mxu0 %v2050
    %v2052 = vand.u32 %v137, 4294901760
    %v2053 = vsub.f32 %v137, %v2052
    %2054 = vmatpush1.msra.mxu0 %v2053
    %v2055 = vand.u32 %v146, 4294901760
    %v2056 = vsub.f32 %v146, %v2055
    %2057 = vmatprep.subr.mxu0 %v2056
    %v2058 = vand.u32 %v145, 4294901760
    %v2059 = vsub.f32 %v145, %v2058
    %2060 = vmatpush1.msra.mxu0 %v2059
    %2061 = vmatprep.subr.mxu0 0.0
    %2062 = vmatpush1.msra.mxu0 0.0
    %2063 = vmatprep.subr.mxu0 0.0
    %2064 = vmatpush1.msra.mxu0 0.0
    %2065 = vmatprep.subr.mxu0 0.0
    %2066 = vmatpush1.msra.mxu0 0.0
    %2067 = vmatprep.subr.mxu0 0.0
    %2068 = vmatpush1.msra.mxu0 0.0
    %2069 = vmatprep.subr.mxu0 0.0
    %2070 = vmatpush1.msra.mxu0 0.0
    %2071 = vmatprep.subr.mxu0 0.0
    %2072 = vmatpush1.msra.mxu0 0.0
    %2073 = vmatprep.subr.mxu0 0.0
    %2074 = vmatpush1.msra.mxu0 0.0
    %2075 = vmatprep.subr.mxu0 0.0
    %2076 = vmatpush1.msra.mxu0 0.0
    %2077 = vmatprep.subr.mxu0 0.0
    %2078 = vmatpush1.msra.mxu0 0.0
    %2079 = vmatprep.subr.mxu0 0.0
    %2080 = vmatpush1.msra.mxu0 0.0
    %2081 = vmatprep.subr.mxu0 0.0
    %2082 = vmatpush1.msra.mxu0 0.0
    %2083 = vmatprep.subr.mxu0 0.0
    %2084 = vmatpush1.msra.mxu0 0.0
    %2085 = vmatprep.subr.mxu0 0.0
    %2086 = vmatpush1.msra.mxu0 0.0
    %2087 = vmatprep.subr.mxu0 0.0
    %2088 = vmatpush1.msra.mxu0 0.0
    %2089 = vmatprep.subr.mxu0 0.0
    %2090 = vmatpush1.msra.mxu0 0.0
    %2091 = vmatprep.subr.mxu0 0.0
    %2092 = vmatpush1.msra.mxu0 0.0
    %2093 = vmatprep.subr.mxu0 0.0
    %2094 = vmatpush1.msra.mxu0 0.0
    %2095 = vmatprep.subr.mxu0 0.0
    %2096 = vmatpush1.msra.mxu0 0.0
    %2097 = vmatprep.subr.mxu0 0.0
    %2098 = vmatpush1.msra.mxu0 0.0
    %2099 = vmatprep.subr.mxu0 0.0
    %2100 = vmatpush1.msra.mxu0 0.0
    %2101 = vmatprep.mubr.f32.mxu0 0.0
    %v2102 = vand.u32 %v193, 4294901760
    %v2103 = vsub.f32 %v193, %v2102
    %2104 = vmatmul.mubr.f32.gmra.mrb[0].mxu0 %v2103
    %v2105 = vpop.f32.mrb[0].mxu0
    %v2106 = vadd.f32 %v1985, %v2105
    %v2107 = vpop.f32.mrb[0].mxu0
    %v2108 = vadd.f32 %v1987, %v2107
    %2109 = vdwg.mxu0
    %v2110 = vand.u32 %v58, 4294901760
    %2111 = vmatprep.subr.mxu0 %v2110
    %v2112 = vand.u32 %v57, 4294901760
    %2113 = vmatpush1.msra.mxu0 %v2112
    %v2114 = vand.u32 %v66, 4294901760
    %2115 = vmatprep.subr.mxu0 %v2114
    %v2116 = vand.u32 %v65, 4294901760
    %2117 = vmatpush1.msra.mxu0 %v2116
    %v2118 = vand.u32 %v74, 4294901760
    %2119 = vmatprep.subr.mxu0 %v2118
    %v2120 = vand.u32 %v73, 4294901760
    %2121 = vmatpush1.msra.mxu0 %v2120
    %v2122 = vand.u32 %v82, 4294901760
    %2123 = vmatprep.subr.mxu0 %v2122
    %v2124 = vand.u32 %v81, 4294901760
    %2125 = vmatpush1.msra.mxu0 %v2124
    %v2126 = vand.u32 %v90, 4294901760
    %2127 = vmatprep.subr.mxu0 %v2126
    %v2128 = vand.u32 %v89, 4294901760
    %2129 = vmatpush1.msra.mxu0 %v2128
    %v2130 = vand.u32 %v98, 4294901760
    %2131 = vmatprep.subr.mxu0 %v2130
    %v2132 = vand.u32 %v97, 4294901760
    %2133 = vmatpush1.msra.mxu0 %v2132
    %v2134 = vand.u32 %v106, 4294901760
    %2135 = vmatprep.subr.mxu0 %v2134
    %v2136 = vand.u32 %v105, 4294901760
    %2137 = vmatpush1.msra.mxu0 %v2136
    %v2138 = vand.u32 %v114, 4294901760
    %2139 = vmatprep.subr.mxu0 %v2138
    %v2140 = vand.u32 %v113, 4294901760
    %2141 = vmatpush1.msra.mxu0 %v2140
    %v2142 = vand.u32 %v122, 4294901760
    %2143 = vmatprep.subr.mxu0 %v2142
    %v2144 = vand.u32 %v121, 4294901760
    %2145 = vmatpush1.msra.mxu0 %v2144
    %v2146 = vand.u32 %v130, 4294901760
    %2147 = vmatprep.subr.mxu0 %v2146
    %v2148 = vand.u32 %v129, 4294901760
    %2149 = vmatpush1.msra.mxu0 %v2148
    %v2150 = vand.u32 %v138, 4294901760
    %2151 = vmatprep.subr.mxu0 %v2150
    %v2152 = vand.u32 %v137, 4294901760
    %2153 = vmatpush1.msra.mxu0 %v2152
    %v2154 = vand.u32 %v146, 4294901760
    %2155 = vmatprep.subr.mxu0 %v2154
    %v2156 = vand.u32 %v145, 4294901760
    %2157 = vmatpush1.msra.mxu0 %v2156
    %2158 = vmatprep.subr.mxu0 0.0
    %2159 = vmatpush1.msra.mxu0 0.0
    %2160 = vmatprep.subr.mxu0 0.0
    %2161 = vmatpush1.msra.mxu0 0.0
    %2162 = vmatprep.subr.mxu0 0.0
    %2163 = vmatpush1.msra.mxu0 0.0
    %2164 = vmatprep.subr.mxu0 0.0
    %2165 = vmatpush1.msra.mxu0 0.0
    %2166 = vmatprep.subr.mxu0 0.0
    %2167 = vmatpush1.msra.mxu0 0.0
    %2168 = vmatprep.subr.mxu0 0.0
    %2169 = vmatpush1.msra.mxu0 0.0
    %2170 = vmatprep.subr.mxu0 0.0
    %2171 = vmatpush1.msra.mxu0 0.0
    %2172 = vmatprep.subr.mxu0 0.0
    %2173 = vmatpush1.msra.mxu0 0.0
    %2174 = vmatprep.subr.mxu0 0.0
    %2175 = vmatpush1.msra.mxu0 0.0
    %2176 = vmatprep.subr.mxu0 0.0
    %2177 = vmatpush1.msra.mxu0 0.0
    %2178 = vmatprep.subr.mxu0 0.0
    %2179 = vmatpush1.msra.mxu0 0.0
    %2180 = vmatprep.subr.mxu0 0.0
    %2181 = vmatpush1.msra.mxu0 0.0
    %2182 = vmatprep.subr.mxu0 0.0
    %2183 = vmatpush1.msra.mxu0 0.0
    %2184 = vmatprep.subr.mxu0 0.0
    %2185 = vmatpush1.msra.mxu0 0.0
    %2186 = vmatprep.subr.mxu0 0.0
    %2187 = vmatpush1.msra.mxu0 0.0
    %2188 = vmatprep.subr.mxu0 0.0
    %2189 = vmatpush1.msra.mxu0 0.0
    %2190 = vmatprep.subr.mxu0 0.0
    %2191 = vmatpush1.msra.mxu0 0.0
    %2192 = vmatprep.subr.mxu0 0.0
    %2193 = vmatpush1.msra.mxu0 0.0
    %2194 = vmatprep.subr.mxu0 0.0
    %2195 = vmatpush1.msra.mxu0 0.0
    %2196 = vmatprep.subr.mxu0 0.0
    %2197 = vmatpush1.msra.mxu0 0.0
    %2198 = vmatprep.mubr.f32.mxu0 0.0
    %v2199 = vand.u32 %v193, 4294901760
    %v2200 = vsub.f32 %v193, %v2199
    %v2201 = vand.u32 %v2200, 4294901760
    %2202 = vmatmul.mubr.f32.gmra.mrb[0].mxu0 %v2201
    %v2203 = vpop.f32.mrb[0].mxu0
    %v2204 = vadd.f32 %v2106, %v2203
    %v2205 = vpop.f32.mrb[0].mxu0
    %v2206 = vadd.f32 %v2108, %v2205
    %2207 = vdwg.mxu0
    %v2208 = vand.u32 %v58, 4294901760
    %v2209 = vsub.f32 %v58, %v2208
    %v2210 = vand.u32 %v2209, 4294901760
    %2211 = vmatprep.subr.mxu0 %v2210
    %v2212 = vand.u32 %v57, 4294901760
    %v2213 = vsub.f32 %v57, %v2212
    %v2214 = vand.u32 %v2213, 4294901760
    %2215 = vmatpush1.msra.mxu0 %v2214
    %v2216 = vand.u32 %v66, 4294901760
    %v2217 = vsub.f32 %v66, %v2216
    %v2218 = vand.u32 %v2217, 4294901760
    %2219 = vmatprep.subr.mxu0 %v2218
    %v2220 = vand.u32 %v65, 4294901760
    %v2221 = vsub.f32 %v65, %v2220
    %v2222 = vand.u32 %v2221, 4294901760
    %2223 = vmatpush1.msra.mxu0 %v2222
    %v2224 = vand.u32 %v74, 4294901760
    %v2225 = vsub.f32 %v74, %v2224
    %v2226 = vand.u32 %v2225, 4294901760
    %2227 = vmatprep.subr.mxu0 %v2226
    %v2228 = vand.u32 %v73, 4294901760
    %v2229 = vsub.f32 %v73, %v2228
    %v2230 = vand.u32 %v2229, 4294901760
    %2231 = vmatpush1.msra.mxu0 %v2230
    %v2232 = vand.u32 %v82, 4294901760
    %v2233 = vsub.f32 %v82, %v2232
    %v2234 = vand.u32 %v2233, 4294901760
    %2235 = vmatprep.subr.mxu0 %v2234
    %v2236 = vand.u32 %v81, 4294901760
    %v2237 = vsub.f32 %v81, %v2236
    %v2238 = vand.u32 %v2237, 4294901760
    %2239 = vmatpush1.msra.mxu0 %v2238
    %v2240 = vand.u32 %v90, 4294901760
    %v2241 = vsub.f32 %v90, %v2240
    %v2242 = vand.u32 %v2241, 4294901760
    %2243 = vmatprep.subr.mxu0 %v2242
    %v2244 = vand.u32 %v89, 4294901760
    %v2245 = vsub.f32 %v89, %v2244
    %v2246 = vand.u32 %v2245, 4294901760
    %2247 = vmatpush1.msra.mxu0 %v2246
    %v2248 = vand.u32 %v98, 4294901760
    %v2249 = vsub.f32 %v98, %v2248
    %v2250 = vand.u32 %v2249, 4294901760
    %2251 = vmatprep.subr.mxu0 %v2250
    %v2252 = vand.u32 %v97, 4294901760
    %v2253 = vsub.f32 %v97, %v2252
    %v2254 = vand.u32 %v2253, 4294901760
    %2255 = vmatpush1.msra.mxu0 %v2254
    %v2256 = vand.u32 %v106, 4294901760
    %v2257 = vsub.f32 %v106, %v2256
    %v2258 = vand.u32 %v2257, 4294901760
    %2259 = vmatprep.subr.mxu0 %v2258
    %v2260 = vand.u32 %v105, 4294901760
    %v2261 = vsub.f32 %v105, %v2260
    %v2262 = vand.u32 %v2261, 4294901760
    %2263 = vmatpush1.msra.mxu0 %v2262
    %v2264 = vand.u32 %v114, 4294901760
    %v2265 = vsub.f32 %v114, %v2264
    %v2266 = vand.u32 %v2265, 4294901760
    %2267 = vmatprep.subr.mxu0 %v2266
    %v2268 = vand.u32 %v113, 4294901760
    %v2269 = vsub.f32 %v113, %v2268
    %v2270 = vand.u32 %v2269, 4294901760
    %2271 = vmatpush1.msra.mxu0 %v2270
    %v2272 = vand.u32 %v122, 4294901760
    %v2273 = vsub.f32 %v122, %v2272
    %v2274 = vand.u32 %v2273, 4294901760
    %2275 = vmatprep.subr.mxu0 %v2274
    %v2276 = vand.u32 %v121, 4294901760
    %v2277 = vsub.f32 %v121, %v2276
    %v2278 = vand.u32 %v2277, 4294901760
    %2279 = vmatpush1.msra.mxu0 %v2278
    %v2280 = vand.u32 %v130, 4294901760
    %v2281 = vsub.f32 %v130, %v2280
    %v2282 = vand.u32 %v2281, 4294901760
    %2283 = vmatprep.subr.mxu0 %v2282
    %v2284 = vand.u32 %v129, 4294901760
    %v2285 = vsub.f32 %v129, %v2284
    %v2286 = vand.u32 %v2285, 4294901760
    %2287 = vmatpush1.msra.mxu0 %v2286
    %v2288 = vand.u32 %v138, 4294901760
    %v2289 = vsub.f32 %v138, %v2288
    %v2290 = vand.u32 %v2289, 4294901760
    %2291 = vmatprep.subr.mxu0 %v2290
    %v2292 = vand.u32 %v137, 4294901760
    %v2293 = vsub.f32 %v137, %v2292
    %v2294 = vand.u32 %v2293, 4294901760
    %2295 = vmatpush1.msra.mxu0 %v2294
    %v2296 = vand.u32 %v146, 4294901760
    %v2297 = vsub.f32 %v146, %v2296
    %v2298 = vand.u32 %v2297, 4294901760
    %2299 = vmatprep.subr.mxu0 %v2298
    %v2300 = vand.u32 %v145, 4294901760
    %v2301 = vsub.f32 %v145, %v2300
    %v2302 = vand.u32 %v2301, 4294901760
    %2303 = vmatpush1.msra.mxu0 %v2302
    %2304 = vmatprep.subr.mxu0 0.0
    %2305 = vmatpush1.msra.mxu0 0.0
    %2306 = vmatprep.subr.mxu0 0.0
    %2307 = vmatpush1.msra.mxu0 0.0
    %2308 = vmatprep.subr.mxu0 0.0
    %2309 = vmatpush1.msra.mxu0 0.0
    %2310 = vmatprep.subr.mxu0 0.0
    %2311 = vmatpush1.msra.mxu0 0.0
    %2312 = vmatprep.subr.mxu0 0.0
    %2313 = vmatpush1.msra.mxu0 0.0
    %2314 = vmatprep.subr.mxu0 0.0
    %2315 = vmatpush1.msra.mxu0 0.0
    %2316 = vmatprep.subr.mxu0 0.0
    %2317 = vmatpush1.msra.mxu0 0.0
    %2318 = vmatprep.subr.mxu0 0.0
    %2319 = vmatpush1.msra.mxu0 0.0
    %2320 = vmatprep.subr.mxu0 0.0
    %2321 = vmatpush1.msra.mxu0 0.0
    %2322 = vmatprep.subr.mxu0 0.0
    %2323 = vmatpush1.msra.mxu0 0.0
    %2324 = vmatprep.subr.mxu0 0.0
    %2325 = vmatpush1.msra.mxu0 0.0
    %2326 = vmatprep.subr.mxu0 0.0
    %2327 = vmatpush1.msra.mxu0 0.0
    %2328 = vmatprep.subr.mxu0 0.0
    %2329 = vmatpush1.msra.mxu0 0.0
    %2330 = vmatprep.subr.mxu0 0.0
    %2331 = vmatpush1.msra.mxu0 0.0
    %2332 = vmatprep.subr.mxu0 0.0
    %2333 = vmatpush1.msra.mxu0 0.0
    %2334 = vmatprep.subr.mxu0 0.0
    %2335 = vmatpush1.msra.mxu0 0.0
    %2336 = vmatprep.subr.mxu0 0.0
    %2337 = vmatpush1.msra.mxu0 0.0
    %2338 = vmatprep.subr.mxu0 0.0
    %2339 = vmatpush1.msra.mxu0 0.0
    %2340 = vmatprep.subr.mxu0 0.0
    %2341 = vmatpush1.msra.mxu0 0.0
    %2342 = vmatprep.subr.mxu0 0.0
    %2343 = vmatpush1.msra.mxu0 0.0
    %2344 = vmatprep.mubr.f32.mxu0 0.0
    %v2345 = vand.u32 %v193, 4294901760
    %2346 = vmatmul.mubr.f32.gmra.mrb[0].mxu0 %v2345
    %v2347 = vpop.f32.mrb[0].mxu0
    %v2348 = vadd.f32 %v2204, %v2347
    %v2349 = vpop.f32.mrb[0].mxu0
    %v2350 = vadd.f32 %v2206, %v2349
    %2351 = vdwg.mxu0
    %v2352 = vand.u32 %v58, 4294901760
    %2353 = vmatprep.subr.mxu0 %v2352
    %v2354 = vand.u32 %v57, 4294901760
    %2355 = vmatpush1.msra.mxu0 %v2354
    %v2356 = vand.u32 %v66, 4294901760
    %2357 = vmatprep.subr.mxu0 %v2356
    %v2358 = vand.u32 %v65, 4294901760
    %2359 = vmatpush1.msra.mxu0 %v2358
    %v2360 = vand.u32 %v74, 4294901760
    %2361 = vmatprep.subr.mxu0 %v2360
    %v2362 = vand.u32 %v73, 4294901760
    %2363 = vmatpush1.msra.mxu0 %v2362
    %v2364 = vand.u32 %v82, 4294901760
    %2365 = vmatprep.subr.mxu0 %v2364
    %v2366 = vand.u32 %v81, 4294901760
    %2367 = vmatpush1.msra.mxu0 %v2366
    %v2368 = vand.u32 %v90, 4294901760
    %2369 = vmatprep.subr.mxu0 %v2368
    %v2370 = vand.u32 %v89, 4294901760
    %2371 = vmatpush1.msra.mxu0 %v2370
    %v2372 = vand.u32 %v98, 4294901760
    %2373 = vmatprep.subr.mxu0 %v2372
    %v2374 = vand.u32 %v97, 4294901760
    %2375 = vmatpush1.msra.mxu0 %v2374
    %v2376 = vand.u32 %v106, 4294901760
    %2377 = vmatprep.subr.mxu0 %v2376
    %v2378 = vand.u32 %v105, 4294901760
    %2379 = vmatpush1.msra.mxu0 %v2378
    %v2380 = vand.u32 %v114, 4294901760
    %2381 = vmatprep.subr.mxu0 %v2380
    %v2382 = vand.u32 %v113, 4294901760
    %2383 = vmatpush1.msra.mxu0 %v2382
    %v2384 = vand.u32 %v122, 4294901760
    %2385 = vmatprep.subr.mxu0 %v2384
    %v2386 = vand.u32 %v121, 4294901760
    %2387 = vmatpush1.msra.mxu0 %v2386
    %v2388 = vand.u32 %v130, 4294901760
    %2389 = vmatprep.subr.mxu0 %v2388
    %v2390 = vand.u32 %v129, 4294901760
    %2391 = vmatpush1.msra.mxu0 %v2390
    %v2392 = vand.u32 %v138, 4294901760
    %2393 = vmatprep.subr.mxu0 %v2392
    %v2394 = vand.u32 %v137, 4294901760
    %2395 = vmatpush1.msra.mxu0 %v2394
    %v2396 = vand.u32 %v146, 4294901760
    %2397 = vmatprep.subr.mxu0 %v2396
    %v2398 = vand.u32 %v145, 4294901760
    %2399 = vmatpush1.msra.mxu0 %v2398
    %2400 = vmatprep.subr.mxu0 0.0
    %2401 = vmatpush1.msra.mxu0 0.0
    %2402 = vmatprep.subr.mxu0 0.0
    %2403 = vmatpush1.msra.mxu0 0.0
    %2404 = vmatprep.subr.mxu0 0.0
    %2405 = vmatpush1.msra.mxu0 0.0
    %2406 = vmatprep.subr.mxu0 0.0
    %2407 = vmatpush1.msra.mxu0 0.0
    %2408 = vmatprep.subr.mxu0 0.0
    %2409 = vmatpush1.msra.mxu0 0.0
    %2410 = vmatprep.subr.mxu0 0.0
    %2411 = vmatpush1.msra.mxu0 0.0
    %2412 = vmatprep.subr.mxu0 0.0
    %2413 = vmatpush1.msra.mxu0 0.0
    %2414 = vmatprep.subr.mxu0 0.0
    %2415 = vmatpush1.msra.mxu0 0.0
    %2416 = vmatprep.subr.mxu0 0.0
    %2417 = vmatpush1.msra.mxu0 0.0
    %2418 = vmatprep.subr.mxu0 0.0
    %2419 = vmatpush1.msra.mxu0 0.0
    %2420 = vmatprep.subr.mxu0 0.0
    %2421 = vmatpush1.msra.mxu0 0.0
    %2422 = vmatprep.subr.mxu0 0.0
    %2423 = vmatpush1.msra.mxu0 0.0
    %2424 = vmatprep.subr.mxu0 0.0
    %2425 = vmatpush1.msra.mxu0 0.0
    %2426 = vmatprep.subr.mxu0 0.0
    %2427 = vmatpush1.msra.mxu0 0.0
    %2428 = vmatprep.subr.mxu0 0.0
    %2429 = vmatpush1.msra.mxu0 0.0
    %2430 = vmatprep.subr.mxu0 0.0
    %2431 = vmatpush1.msra.mxu0 0.0
    %2432 = vmatprep.subr.mxu0 0.0
    %2433 = vmatpush1.msra.mxu0 0.0
    %2434 = vmatprep.subr.mxu0 0.0
    %2435 = vmatpush1.msra.mxu0 0.0
    %2436 = vmatprep.subr.mxu0 0.0
    %2437 = vmatpush1.msra.mxu0 0.0
    %2438 = vmatprep.subr.mxu0 0.0
    %2439 = vmatpush1.msra.mxu0 0.0
    %2440 = vmatprep.mubr.f32.mxu0 0.0
    %v2441 = vand.u32 %v193, 4294901760
    %2442 = vmatmul.mubr.f32.gmra.mrb[0].mxu0 %v2441
    %v2443 = vpop.f32.mrb[0].mxu0
    %v2444 = vadd.f32 %v2348, %v2443
    %v2445 = vpop.f32.mrb[0].mxu0
    %v2446 = vadd.f32 %v2350, %v2445
    %2447 = vdwg.mxu0
    %v2448 = vand.u32 %v60, 4294901760
    %2449 = vmatprep.subr.mxu0 %v2448
    %v2450 = vand.u32 %v59, 4294901760
    %2451 = vmatpush1.msra.mxu0 %v2450
    %v2452 = vand.u32 %v68, 4294901760
    %2453 = vmatprep.subr.mxu0 %v2452
    %v2454 = vand.u32 %v67, 4294901760
    %2455 = vmatpush1.msra.mxu0 %v2454
    %v2456 = vand.u32 %v76, 4294901760
    %2457 = vmatprep.subr.mxu0 %v2456
    %v2458 = vand.u32 %v75, 4294901760
    %2459 = vmatpush1.msra.mxu0 %v2458
    %v2460 = vand.u32 %v84, 4294901760
    %2461 = vmatprep.subr.mxu0 %v2460
    %v2462 = vand.u32 %v83, 4294901760
    %2463 = vmatpush1.msra.mxu0 %v2462
    %v2464 = vand.u32 %v92, 4294901760
    %2465 = vmatprep.subr.mxu0 %v2464
    %v2466 = vand.u32 %v91, 4294901760
    %2467 = vmatpush1.msra.mxu0 %v2466
    %v2468 = vand.u32 %v100, 4294901760
    %2469 = vmatprep.subr.mxu0 %v2468
    %v2470 = vand.u32 %v99, 4294901760
    %2471 = vmatpush1.msra.mxu0 %v2470
    %v2472 = vand.u32 %v108, 4294901760
    %2473 = vmatprep.subr.mxu0 %v2472
    %v2474 = vand.u32 %v107, 4294901760
    %2475 = vmatpush1.msra.mxu0 %v2474
    %v2476 = vand.u32 %v116, 4294901760
    %2477 = vmatprep.subr.mxu0 %v2476
    %v2478 = vand.u32 %v115, 4294901760
    %2479 = vmatpush1.msra.mxu0 %v2478
    %v2480 = vand.u32 %v124, 4294901760
    %2481 = vmatprep.subr.mxu0 %v2480
    %v2482 = vand.u32 %v123, 4294901760
    %2483 = vmatpush1.msra.mxu0 %v2482
    %v2484 = vand.u32 %v132, 4294901760
    %2485 = vmatprep.subr.mxu0 %v2484
    %v2486 = vand.u32 %v131, 4294901760
    %2487 = vmatpush1.msra.mxu0 %v2486
    %v2488 = vand.u32 %v140, 4294901760
    %2489 = vmatprep.subr.mxu0 %v2488
    %v2490 = vand.u32 %v139, 4294901760
    %2491 = vmatpush1.msra.mxu0 %v2490
    %v2492 = vand.u32 %v148, 4294901760
    %2493 = vmatprep.subr.mxu0 %v2492
    %v2494 = vand.u32 %v147, 4294901760
    %2495 = vmatpush1.msra.mxu0 %v2494
    %2496 = vmatprep.subr.mxu0 0.0
    %2497 = vmatpush1.msra.mxu0 0.0
    %2498 = vmatprep.subr.mxu0 0.0
    %2499 = vmatpush1.msra.mxu0 0.0
    %2500 = vmatprep.subr.mxu0 0.0
    %2501 = vmatpush1.msra.mxu0 0.0
    %2502 = vmatprep.subr.mxu0 0.0
    %2503 = vmatpush1.msra.mxu0 0.0
    %2504 = vmatprep.subr.mxu0 0.0
    %2505 = vmatpush1.msra.mxu0 0.0
    %2506 = vmatprep.subr.mxu0 0.0
    %2507 = vmatpush1.msra.mxu0 0.0
    %2508 = vmatprep.subr.mxu0 0.0
    %2509 = vmatpush1.msra.mxu0 0.0
    %2510 = vmatprep.subr.mxu0 0.0
    %2511 = vmatpush1.msra.mxu0 0.0
    %2512 = vmatprep.subr.mxu0 0.0
    %2513 = vmatpush1.msra.mxu0 0.0
    %2514 = vmatprep.subr.mxu0 0.0
    %2515 = vmatpush1.msra.mxu0 0.0
    %2516 = vmatprep.subr.mxu0 0.0
    %2517 = vmatpush1.msra.mxu0 0.0
    %2518 = vmatprep.subr.mxu0 0.0
    %2519 = vmatpush1.msra.mxu0 0.0
    %2520 = vmatprep.subr.mxu0 0.0
    %2521 = vmatpush1.msra.mxu0 0.0
    %2522 = vmatprep.subr.mxu0 0.0
    %2523 = vmatpush1.msra.mxu0 0.0
    %2524 = vmatprep.subr.mxu0 0.0
    %2525 = vmatpush1.msra.mxu0 0.0
    %2526 = vmatprep.subr.mxu0 0.0
    %2527 = vmatpush1.msra.mxu0 0.0
    %2528 = vmatprep.subr.mxu0 0.0
    %2529 = vmatpush1.msra.mxu0 0.0
    %2530 = vmatprep.subr.mxu0 0.0
    %2531 = vmatpush1.msra.mxu0 0.0
    %2532 = vmatprep.subr.mxu0 0.0
    %2533 = vmatpush1.msra.mxu0 0.0
    %2534 = vmatprep.subr.mxu0 0.0
    %2535 = vmatpush1.msra.mxu0 0.0
    %2536 = vmatprep.mubr.f32.mxu0 0.0
    %v2537 = vand.u32 %v193, 4294901760
    %v2538 = vsub.f32 %v193, %v2537
    %v2539 = vand.u32 %v2538, 4294901760
    %v2540 = vsub.f32 %v2538, %v2539
    %v2541 = vand.u32 %v2540, 4294901760
    %2542 = vmatmul.mubr.f32.gmra.mrb[0].mxu0 %v2541
    %v2543 = vpop.f32.mrb[0].mxu0
    %v2544 = vadd.f32 %v178, %v2543
    %v2545 = vpop.f32.mrb[0].mxu0
    %v2546 = vadd.f32 %v182, %v2545
    %2547 = vdwg.mxu0
    %v2548 = vand.u32 %v60, 4294901760
    %v2549 = vsub.f32 %v60, %v2548
    %v2550 = vand.u32 %v2549, 4294901760
    %v2551 = vsub.f32 %v2549, %v2550
    %v2552 = vand.u32 %v2551, 4294901760
    %2553 = vmatprep.subr.mxu0 %v2552
    %v2554 = vand.u32 %v59, 4294901760
    %v2555 = vsub.f32 %v59, %v2554
    %v2556 = vand.u32 %v2555, 4294901760
    %v2557 = vsub.f32 %v2555, %v2556
    %v2558 = vand.u32 %v2557, 4294901760
    %2559 = vmatpush1.msra.mxu0 %v2558
    %v2560 = vand.u32 %v68, 4294901760
    %v2561 = vsub.f32 %v68, %v2560
    %v2562 = vand.u32 %v2561, 4294901760
    %v2563 = vsub.f32 %v2561, %v2562
    %v2564 = vand.u32 %v2563, 4294901760
    %2565 = vmatprep.subr.mxu0 %v2564
    %v2566 = vand.u32 %v67, 4294901760
    %v2567 = vsub.f32 %v67, %v2566
    %v2568 = vand.u32 %v2567, 4294901760
    %v2569 = vsub.f32 %v2567, %v2568
    %v2570 = vand.u32 %v2569, 4294901760
    %2571 = vmatpush1.msra.mxu0 %v2570
    %v2572 = vand.u32 %v76, 4294901760
    %v2573 = vsub.f32 %v76, %v2572
    %v2574 = vand.u32 %v2573, 4294901760
    %v2575 = vsub.f32 %v2573, %v2574
    %v2576 = vand.u32 %v2575, 4294901760
    %2577 = vmatprep.subr.mxu0 %v2576
    %v2578 = vand.u32 %v75, 4294901760
    %v2579 = vsub.f32 %v75, %v2578
    %v2580 = vand.u32 %v2579, 4294901760
    %v2581 = vsub.f32 %v2579, %v2580
    %v2582 = vand.u32 %v2581, 4294901760
    %2583 = vmatpush1.msra.mxu0 %v2582
    %v2584 = vand.u32 %v84, 4294901760
    %v2585 = vsub.f32 %v84, %v2584
    %v2586 = vand.u32 %v2585, 4294901760
    %v2587 = vsub.f32 %v2585, %v2586
    %v2588 = vand.u32 %v2587, 4294901760
    %2589 = vmatprep.subr.mxu0 %v2588
    %v2590 = vand.u32 %v83, 4294901760
    %v2591 = vsub.f32 %v83, %v2590
    %v2592 = vand.u32 %v2591, 4294901760
    %v2593 = vsub.f32 %v2591, %v2592
    %v2594 = vand.u32 %v2593, 4294901760
    %2595 = vmatpush1.msra.mxu0 %v2594
    %v2596 = vand.u32 %v92, 4294901760
    %v2597 = vsub.f32 %v92, %v2596
    %v2598 = vand.u32 %v2597, 4294901760
    %v2599 = vsub.f32 %v2597, %v2598
    %v2600 = vand.u32 %v2599, 4294901760
    %2601 = vmatprep.subr.mxu0 %v2600
    %v2602 = vand.u32 %v91, 4294901760
    %v2603 = vsub.f32 %v91, %v2602
    %v2604 = vand.u32 %v2603, 4294901760
    %v2605 = vsub.f32 %v2603, %v2604
    %v2606 = vand.u32 %v2605, 4294901760
    %2607 = vmatpush1.msra.mxu0 %v2606
    %v2608 = vand.u32 %v100, 4294901760
    %v2609 = vsub.f32 %v100, %v2608
    %v2610 = vand.u32 %v2609, 4294901760
    %v2611 = vsub.f32 %v2609, %v2610
    %v2612 = vand.u32 %v2611, 4294901760
    %2613 = vmatprep.subr.mxu0 %v2612
    %v2614 = vand.u32 %v99, 4294901760
    %v2615 = vsub.f32 %v99, %v2614
    %v2616 = vand.u32 %v2615, 4294901760
    %v2617 = vsub.f32 %v2615, %v2616
    %v2618 = vand.u32 %v2617, 4294901760
    %2619 = vmatpush1.msra.mxu0 %v2618
    %v2620 = vand.u32 %v108, 4294901760
    %v2621 = vsub.f32 %v108, %v2620
    %v2622 = vand.u32 %v2621, 4294901760
    %v2623 = vsub.f32 %v2621, %v2622
    %v2624 = vand.u32 %v2623, 4294901760
    %2625 = vmatprep.subr.mxu0 %v2624
    %v2626 = vand.u32 %v107, 4294901760
    %v2627 = vsub.f32 %v107, %v2626
    %v2628 = vand.u32 %v2627, 4294901760
    %v2629 = vsub.f32 %v2627, %v2628
    %v2630 = vand.u32 %v2629, 4294901760
    %2631 = vmatpush1.msra.mxu0 %v2630
    %v2632 = vand.u32 %v116, 4294901760
    %v2633 = vsub.f32 %v116, %v2632
    %v2634 = vand.u32 %v2633, 4294901760
    %v2635 = vsub.f32 %v2633, %v2634
    %v2636 = vand.u32 %v2635, 4294901760
    %2637 = vmatprep.subr.mxu0 %v2636
    %v2638 = vand.u32 %v115, 4294901760
    %v2639 = vsub.f32 %v115, %v2638
    %v2640 = vand.u32 %v2639, 4294901760
    %v2641 = vsub.f32 %v2639, %v2640
    %v2642 = vand.u32 %v2641, 4294901760
    %2643 = vmatpush1.msra.mxu0 %v2642
    %v2644 = vand.u32 %v124, 4294901760
    %v2645 = vsub.f32 %v124, %v2644
    %v2646 = vand.u32 %v2645, 4294901760
    %v2647 = vsub.f32 %v2645, %v2646
    %v2648 = vand.u32 %v2647, 4294901760
    %2649 = vmatprep.subr.mxu0 %v2648
    %v2650 = vand.u32 %v123, 4294901760
    %v2651 = vsub.f32 %v123, %v2650
    %v2652 = vand.u32 %v2651, 4294901760
    %v2653 = vsub.f32 %v2651, %v2652
    %v2654 = vand.u32 %v2653, 4294901760
    %2655 = vmatpush1.msra.mxu0 %v2654
    %v2656 = vand.u32 %v132, 4294901760
    %v2657 = vsub.f32 %v132, %v2656
    %v2658 = vand.u32 %v2657, 4294901760
    %v2659 = vsub.f32 %v2657, %v2658
    %v2660 = vand.u32 %v2659, 4294901760
    %2661 = vmatprep.subr.mxu0 %v2660
    %v2662 = vand.u32 %v131, 4294901760
    %v2663 = vsub.f32 %v131, %v2662
    %v2664 = vand.u32 %v2663, 4294901760
    %v2665 = vsub.f32 %v2663, %v2664
    %v2666 = vand.u32 %v2665, 4294901760
    %2667 = vmatpush1.msra.mxu0 %v2666
    %v2668 = vand.u32 %v140, 4294901760
    %v2669 = vsub.f32 %v140, %v2668
    %v2670 = vand.u32 %v2669, 4294901760
    %v2671 = vsub.f32 %v2669, %v2670
    %v2672 = vand.u32 %v2671, 4294901760
    %2673 = vmatprep.subr.mxu0 %v2672
    %v2674 = vand.u32 %v139, 4294901760
    %v2675 = vsub.f32 %v139, %v2674
    %v2676 = vand.u32 %v2675, 4294901760
    %v2677 = vsub.f32 %v2675, %v2676
    %v2678 = vand.u32 %v2677, 4294901760
    %2679 = vmatpush1.msra.mxu0 %v2678
    %v2680 = vand.u32 %v148, 4294901760
    %v2681 = vsub.f32 %v148, %v2680
    %v2682 = vand.u32 %v2681, 4294901760
    %v2683 = vsub.f32 %v2681, %v2682
    %v2684 = vand.u32 %v2683, 4294901760
    %2685 = vmatprep.subr.mxu0 %v2684
    %v2686 = vand.u32 %v147, 4294901760
    %v2687 = vsub.f32 %v147, %v2686
    %v2688 = vand.u32 %v2687, 4294901760
    %v2689 = vsub.f32 %v2687, %v2688
    %v2690 = vand.u32 %v2689, 4294901760
    %2691 = vmatpush1.msra.mxu0 %v2690
    %2692 = vmatprep.subr.mxu0 0.0
    %2693 = vmatpush1.msra.mxu0 0.0
    %2694 = vmatprep.subr.mxu0 0.0
    %2695 = vmatpush1.msra.mxu0 0.0
    %2696 = vmatprep.subr.mxu0 0.0
    %2697 = vmatpush1.msra.mxu0 0.0
    %2698 = vmatprep.subr.mxu0 0.0
    %2699 = vmatpush1.msra.mxu0 0.0
    %2700 = vmatprep.subr.mxu0 0.0
    %2701 = vmatpush1.msra.mxu0 0.0
    %2702 = vmatprep.subr.mxu0 0.0
    %2703 = vmatpush1.msra.mxu0 0.0
    %2704 = vmatprep.subr.mxu0 0.0
    %2705 = vmatpush1.msra.mxu0 0.0
    %2706 = vmatprep.subr.mxu0 0.0
    %2707 = vmatpush1.msra.mxu0 0.0
    %2708 = vmatprep.subr.mxu0 0.0
    %2709 = vmatpush1.msra.mxu0 0.0
    %2710 = vmatprep.subr.mxu0 0.0
    %2711 = vmatpush1.msra.mxu0 0.0
    %2712 = vmatprep.subr.mxu0 0.0
    %2713 = vmatpush1.msra.mxu0 0.0
    %2714 = vmatprep.subr.mxu0 0.0
    %2715 = vmatpush1.msra.mxu0 0.0
    %2716 = vmatprep.subr.mxu0 0.0
    %2717 = vmatpush1.msra.mxu0 0.0
    %2718 = vmatprep.subr.mxu0 0.0
    %2719 = vmatpush1.msra.mxu0 0.0
    %2720 = vmatprep.subr.mxu0 0.0
    %2721 = vmatpush1.msra.mxu0 0.0
    %2722 = vmatprep.subr.mxu0 0.0
    %2723 = vmatpush1.msra.mxu0 0.0
    %2724 = vmatprep.subr.mxu0 0.0
    %2725 = vmatpush1.msra.mxu0 0.0
    %2726 = vmatprep.subr.mxu0 0.0
    %2727 = vmatpush1.msra.mxu0 0.0
    %2728 = vmatprep.subr.mxu0 0.0
    %2729 = vmatpush1.msra.mxu0 0.0
    %2730 = vmatprep.subr.mxu0 0.0
    %2731 = vmatpush1.msra.mxu0 0.0
    %2732 = vmatprep.mubr.f32.mxu0 0.0
    %v2733 = vand.u32 %v193, 4294901760
    %2734 = vmatmul.mubr.f32.gmra.mrb[0].mxu0 %v2733
    %v2735 = vpop.f32.mrb[0].mxu0
    %v2736 = vadd.f32 %v2544, %v2735
    %v2737 = vpop.f32.mrb[0].mxu0
    %v2738 = vadd.f32 %v2546, %v2737
    %2739 = vdwg.mxu0
    %v2740 = vand.u32 %v60, 4294901760
    %v2741 = vsub.f32 %v60, %v2740
    %2742 = vmatprep.subr.mxu0 %v2741
    %v2743 = vand.u32 %v59, 4294901760
    %v2744 = vsub.f32 %v59, %v2743
    %2745 = vmatpush1.msra.mxu0 %v2744
    %v2746 = vand.u32 %v68, 4294901760
    %v2747 = vsub.f32 %v68, %v2746
    %2748 = vmatprep.subr.mxu0 %v2747
    %v2749 = vand.u32 %v67, 4294901760
    %v2750 = vsub.f32 %v67, %v2749
    %2751 = vmatpush1.msra.mxu0 %v2750
    %v2752 = vand.u32 %v76, 4294901760
    %v2753 = vsub.f32 %v76, %v2752
    %2754 = vmatprep.subr.mxu0 %v2753
    %v2755 = vand.u32 %v75, 4294901760
    %v2756 = vsub.f32 %v75, %v2755
    %2757 = vmatpush1.msra.mxu0 %v2756
    %v2758 = vand.u32 %v84, 4294901760
    %v2759 = vsub.f32 %v84, %v2758
    %2760 = vmatprep.subr.mxu0 %v2759
    %v2761 = vand.u32 %v83, 4294901760
    %v2762 = vsub.f32 %v83, %v2761
    %2763 = vmatpush1.msra.mxu0 %v2762
    %v2764 = vand.u32 %v92, 4294901760
    %v2765 = vsub.f32 %v92, %v2764
    %2766 = vmatprep.subr.mxu0 %v2765
    %v2767 = vand.u32 %v91, 4294901760
    %v2768 = vsub.f32 %v91, %v2767
    %2769 = vmatpush1.msra.mxu0 %v2768
    %v2770 = vand.u32 %v100, 4294901760
    %v2771 = vsub.f32 %v100, %v2770
    %2772 = vmatprep.subr.mxu0 %v2771
    %v2773 = vand.u32 %v99, 4294901760
    %v2774 = vsub.f32 %v99, %v2773
    %2775 = vmatpush1.msra.mxu0 %v2774
    %v2776 = vand.u32 %v108, 4294901760
    %v2777 = vsub.f32 %v108, %v2776
    %2778 = vmatprep.subr.mxu0 %v2777
    %v2779 = vand.u32 %v107, 4294901760
    %v2780 = vsub.f32 %v107, %v2779
    %2781 = vmatpush1.msra.mxu0 %v2780
    %v2782 = vand.u32 %v116, 4294901760
    %v2783 = vsub.f32 %v116, %v2782
    %2784 = vmatprep.subr.mxu0 %v2783
    %v2785 = vand.u32 %v115, 4294901760
    %v2786 = vsub.f32 %v115, %v2785
    %2787 = vmatpush1.msra.mxu0 %v2786
    %v2788 = vand.u32 %v124, 4294901760
    %v2789 = vsub.f32 %v124, %v2788
    %2790 = vmatprep.subr.mxu0 %v2789
    %v2791 = vand.u32 %v123, 4294901760
    %v2792 = vsub.f32 %v123, %v2791
    %2793 = vmatpush1.msra.mxu0 %v2792
    %v2794 = vand.u32 %v132, 4294901760
    %v2795 = vsub.f32 %v132, %v2794
    %2796 = vmatprep.subr.mxu0 %v2795
    %v2797 = vand.u32 %v131, 4294901760
    %v2798 = vsub.f32 %v131, %v2797
    %2799 = vmatpush1.msra.mxu0 %v2798
    %v2800 = vand.u32 %v140, 4294901760
    %v2801 = vsub.f32 %v140, %v2800
    %2802 = vmatprep.subr.mxu0 %v2801
    %v2803 = vand.u32 %v139, 4294901760
    %v2804 = vsub.f32 %v139, %v2803
    %2805 = vmatpush1.msra.mxu0 %v2804
    %v2806 = vand.u32 %v148, 4294901760
    %v2807 = vsub.f32 %v148, %v2806
    %2808 = vmatprep.subr.mxu0 %v2807
    %v2809 = vand.u32 %v147, 4294901760
    %v2810 = vsub.f32 %v147, %v2809
    %2811 = vmatpush1.msra.mxu0 %v2810
    %2812 = vmatprep.subr.mxu0 0.0
    %2813 = vmatpush1.msra.mxu0 0.0
    %2814 = vmatprep.subr.mxu0 0.0
    %2815 = vmatpush1.msra.mxu0 0.0
    %2816 = vmatprep.subr.mxu0 0.0
    %2817 = vmatpush1.msra.mxu0 0.0
    %2818 = vmatprep.subr.mxu0 0.0
    %2819 = vmatpush1.msra.mxu0 0.0
    %2820 = vmatprep.subr.mxu0 0.0
    %2821 = vmatpush1.msra.mxu0 0.0
    %2822 = vmatprep.subr.mxu0 0.0
    %2823 = vmatpush1.msra.mxu0 0.0
    %2824 = vmatprep.subr.mxu0 0.0
    %2825 = vmatpush1.msra.mxu0 0.0
    %2826 = vmatprep.subr.mxu0 0.0
    %2827 = vmatpush1.msra.mxu0 0.0
    %2828 = vmatprep.subr.mxu0 0.0
    %2829 = vmatpush1.msra.mxu0 0.0
    %2830 = vmatprep.subr.mxu0 0.0
    %2831 = vmatpush1.msra.mxu0 0.0
    %2832 = vmatprep.subr.mxu0 0.0
    %2833 = vmatpush1.msra.mxu0 0.0
    %2834 = vmatprep.subr.mxu0 0.0
    %2835 = vmatpush1.msra.mxu0 0.0
    %2836 = vmatprep.subr.mxu0 0.0
    %2837 = vmatpush1.msra.mxu0 0.0
    %2838 = vmatprep.subr.mxu0 0.0
    %2839 = vmatpush1.msra.mxu0 0.0
    %2840 = vmatprep.subr.mxu0 0.0
    %2841 = vmatpush1.msra.mxu0 0.0
    %2842 = vmatprep.subr.mxu0 0.0
    %2843 = vmatpush1.msra.mxu0 0.0
    %2844 = vmatprep.subr.mxu0 0.0
    %2845 = vmatpush1.msra.mxu0 0.0
    %2846 = vmatprep.subr.mxu0 0.0
    %2847 = vmatpush1.msra.mxu0 0.0
    %2848 = vmatprep.subr.mxu0 0.0
    %2849 = vmatpush1.msra.mxu0 0.0
    %2850 = vmatprep.subr.mxu0 0.0
    %2851 = vmatpush1.msra.mxu0 0.0
    %2852 = vmatprep.mubr.f32.mxu0 0.0
    %v2853 = vand.u32 %v193, 4294901760
    %v2854 = vsub.f32 %v193, %v2853
    %2855 = vmatmul.mubr.f32.gmra.mrb[0].mxu0 %v2854
    %v2856 = vpop.f32.mrb[0].mxu0
    %v2857 = vadd.f32 %v2736, %v2856
    %v2858 = vpop.f32.mrb[0].mxu0
    %v2859 = vadd.f32 %v2738, %v2858
    %2860 = vdwg.mxu0
    %v2861 = vand.u32 %v60, 4294901760
    %2862 = vmatprep.subr.mxu0 %v2861
    %v2863 = vand.u32 %v59, 4294901760
    %2864 = vmatpush1.msra.mxu0 %v2863
    %v2865 = vand.u32 %v68, 4294901760
    %2866 = vmatprep.subr.mxu0 %v2865
    %v2867 = vand.u32 %v67, 4294901760
    %2868 = vmatpush1.msra.mxu0 %v2867
    %v2869 = vand.u32 %v76, 4294901760
    %2870 = vmatprep.subr.mxu0 %v2869
    %v2871 = vand.u32 %v75, 4294901760
    %2872 = vmatpush1.msra.mxu0 %v2871
    %v2873 = vand.u32 %v84, 4294901760
    %2874 = vmatprep.subr.mxu0 %v2873
    %v2875 = vand.u32 %v83, 4294901760
    %2876 = vmatpush1.msra.mxu0 %v2875
    %v2877 = vand.u32 %v92, 4294901760
    %2878 = vmatprep.subr.mxu0 %v2877
    %v2879 = vand.u32 %v91, 4294901760
    %2880 = vmatpush1.msra.mxu0 %v2879
    %v2881 = vand.u32 %v100, 4294901760
    %2882 = vmatprep.subr.mxu0 %v2881
    %v2883 = vand.u32 %v99, 4294901760
    %2884 = vmatpush1.msra.mxu0 %v2883
    %v2885 = vand.u32 %v108, 4294901760
    %2886 = vmatprep.subr.mxu0 %v2885
    %v2887 = vand.u32 %v107, 4294901760
    %2888 = vmatpush1.msra.mxu0 %v2887
    %v2889 = vand.u32 %v116, 4294901760
    %2890 = vmatprep.subr.mxu0 %v2889
    %v2891 = vand.u32 %v115, 4294901760
    %2892 = vmatpush1.msra.mxu0 %v2891
    %v2893 = vand.u32 %v124, 4294901760
    %2894 = vmatprep.subr.mxu0 %v2893
    %v2895 = vand.u32 %v123, 4294901760
    %2896 = vmatpush1.msra.mxu0 %v2895
    %v2897 = vand.u32 %v132, 4294901760
    %2898 = vmatprep.subr.mxu0 %v2897
    %v2899 = vand.u32 %v131, 4294901760
    %2900 = vmatpush1.msra.mxu0 %v2899
    %v2901 = vand.u32 %v140, 4294901760
    %2902 = vmatprep.subr.mxu0 %v2901
    %v2903 = vand.u32 %v139, 4294901760
    %2904 = vmatpush1.msra.mxu0 %v2903
    %v2905 = vand.u32 %v148, 4294901760
    %2906 = vmatprep.subr.mxu0 %v2905
    %v2907 = vand.u32 %v147, 4294901760
    %2908 = vmatpush1.msra.mxu0 %v2907
    %2909 = vmatprep.subr.mxu0 0.0
    %2910 = vmatpush1.msra.mxu0 0.0
    %2911 = vmatprep.subr.mxu0 0.0
    %2912 = vmatpush1.msra.mxu0 0.0
    %2913 = vmatprep.subr.mxu0 0.0
    %2914 = vmatpush1.msra.mxu0 0.0
    %2915 = vmatprep.subr.mxu0 0.0
    %2916 = vmatpush1.msra.mxu0 0.0
    %2917 = vmatprep.subr.mxu0 0.0
    %2918 = vmatpush1.msra.mxu0 0.0
    %2919 = vmatprep.subr.mxu0 0.0
    %2920 = vmatpush1.msra.mxu0 0.0
    %2921 = vmatprep.subr.mxu0 0.0
    %2922 = vmatpush1.msra.mxu0 0.0
    %2923 = vmatprep.subr.mxu0 0.0
    %2924 = vmatpush1.msra.mxu0 0.0
    %2925 = vmatprep.subr.mxu0 0.0
    %2926 = vmatpush1.msra.mxu0 0.0
    %2927 = vmatprep.subr.mxu0 0.0
    %2928 = vmatpush1.msra.mxu0 0.0
    %2929 = vmatprep.subr.mxu0 0.0
    %2930 = vmatpush1.msra.mxu0 0.0
    %2931 = vmatprep.subr.mxu0 0.0
    %2932 = vmatpush1.msra.mxu0 0.0
    %2933 = vmatprep.subr.mxu0 0.0
    %2934 = vmatpush1.msra.mxu0 0.0
    %2935 = vmatprep.subr.mxu0 0.0
    %2936 = vmatpush1.msra.mxu0 0.0
    %2937 = vmatprep.subr.mxu0 0.0
    %2938 = vmatpush1.msra.mxu0 0.0
    %2939 = vmatprep.subr.mxu0 0.0
    %2940 = vmatpush1.msra.mxu0 0.0
    %2941 = vmatprep.subr.mxu0 0.0
    %2942 = vmatpush1.msra.mxu0 0.0
    %2943 = vmatprep.subr.mxu0 0.0
    %2944 = vmatpush1.msra.mxu0 0.0
    %2945 = vmatprep.subr.mxu0 0.0
    %2946 = vmatpush1.msra.mxu0 0.0
    %2947 = vmatprep.subr.mxu0 0.0
    %2948 = vmatpush1.msra.mxu0 0.0
    %2949 = vmatprep.mubr.f32.mxu0 0.0
    %v2950 = vand.u32 %v193, 4294901760
    %v2951 = vsub.f32 %v193, %v2950
    %v2952 = vand.u32 %v2951, 4294901760
    %2953 = vmatmul.mubr.f32.gmra.mrb[0].mxu0 %v2952
    %v2954 = vpop.f32.mrb[0].mxu0
    %v2955 = vadd.f32 %v2857, %v2954
    %v2956 = vpop.f32.mrb[0].mxu0
    %v2957 = vadd.f32 %v2859, %v2956
    %2958 = vdwg.mxu0
    %v2959 = vand.u32 %v60, 4294901760
    %v2960 = vsub.f32 %v60, %v2959
    %v2961 = vand.u32 %v2960, 4294901760
    %2962 = vmatprep.subr.mxu0 %v2961
    %v2963 = vand.u32 %v59, 4294901760
    %v2964 = vsub.f32 %v59, %v2963
    %v2965 = vand.u32 %v2964, 4294901760
    %2966 = vmatpush1.msra.mxu0 %v2965
    %v2967 = vand.u32 %v68, 4294901760
    %v2968 = vsub.f32 %v68, %v2967
    %v2969 = vand.u32 %v2968, 4294901760
    %2970 = vmatprep.subr.mxu0 %v2969
    %v2971 = vand.u32 %v67, 4294901760
    %v2972 = vsub.f32 %v67, %v2971
    %v2973 = vand.u32 %v2972, 4294901760
    %2974 = vmatpush1.msra.mxu0 %v2973
    %v2975 = vand.u32 %v76, 4294901760
    %v2976 = vsub.f32 %v76, %v2975
    %v2977 = vand.u32 %v2976, 4294901760
    %2978 = vmatprep.subr.mxu0 %v2977
    %v2979 = vand.u32 %v75, 4294901760
    %v2980 = vsub.f32 %v75, %v2979
    %v2981 = vand.u32 %v2980, 4294901760
    %2982 = vmatpush1.msra.mxu0 %v2981
    %v2983 = vand.u32 %v84, 4294901760
    %v2984 = vsub.f32 %v84, %v2983
    %v2985 = vand.u32 %v2984, 4294901760
    %2986 = vmatprep.subr.mxu0 %v2985
    %v2987 = vand.u32 %v83, 4294901760
    %v2988 = vsub.f32 %v83, %v2987
    %v2989 = vand.u32 %v2988, 4294901760
    %2990 = vmatpush1.msra.mxu0 %v2989
    %v2991 = vand.u32 %v92, 4294901760
    %v2992 = vsub.f32 %v92, %v2991
    %v2993 = vand.u32 %v2992, 4294901760
    %2994 = vmatprep.subr.mxu0 %v2993
    %v2995 = vand.u32 %v91, 4294901760
    %v2996 = vsub.f32 %v91, %v2995
    %v2997 = vand.u32 %v2996, 4294901760
    %2998 = vmatpush1.msra.mxu0 %v2997
    %v2999 = vand.u32 %v100, 4294901760
    %v3000 = vsub.f32 %v100, %v2999
    %v3001 = vand.u32 %v3000, 4294901760
    %3002 = vmatprep.subr.mxu0 %v3001
    %v3003 = vand.u32 %v99, 4294901760
    %v3004 = vsub.f32 %v99, %v3003
    %v3005 = vand.u32 %v3004, 4294901760
    %3006 = vmatpush1.msra.mxu0 %v3005
    %v3007 = vand.u32 %v108, 4294901760
    %v3008 = vsub.f32 %v108, %v3007
    %v3009 = vand.u32 %v3008, 4294901760
    %3010 = vmatprep.subr.mxu0 %v3009
    %v3011 = vand.u32 %v107, 4294901760
    %v3012 = vsub.f32 %v107, %v3011
    %v3013 = vand.u32 %v3012, 4294901760
    %3014 = vmatpush1.msra.mxu0 %v3013
    %v3015 = vand.u32 %v116, 4294901760
    %v3016 = vsub.f32 %v116, %v3015
    %v3017 = vand.u32 %v3016, 4294901760
    %3018 = vmatprep.subr.mxu0 %v3017
    %v3019 = vand.u32 %v115, 4294901760
    %v3020 = vsub.f32 %v115, %v3019
    %v3021 = vand.u32 %v3020, 4294901760
    %3022 = vmatpush1.msra.mxu0 %v3021
    %v3023 = vand.u32 %v124, 4294901760
    %v3024 = vsub.f32 %v124, %v3023
    %v3025 = vand.u32 %v3024, 4294901760
    %3026 = vmatprep.subr.mxu0 %v3025
    %v3027 = vand.u32 %v123, 4294901760
    %v3028 = vsub.f32 %v123, %v3027
    %v3029 = vand.u32 %v3028, 4294901760
    %3030 = vmatpush1.msra.mxu0 %v3029
    %v3031 = vand.u32 %v132, 4294901760
    %v3032 = vsub.f32 %v132, %v3031
    %v3033 = vand.u32 %v3032, 4294901760
    %3034 = vmatprep.subr.mxu0 %v3033
    %v3035 = vand.u32 %v131, 4294901760
    %v3036 = vsub.f32 %v131, %v3035
    %v3037 = vand.u32 %v3036, 4294901760
    %3038 = vmatpush1.msra.mxu0 %v3037
    %v3039 = vand.u32 %v140, 4294901760
    %v3040 = vsub.f32 %v140, %v3039
    %v3041 = vand.u32 %v3040, 4294901760
    %3042 = vmatprep.subr.mxu0 %v3041
    %v3043 = vand.u32 %v139, 4294901760
    %v3044 = vsub.f32 %v139, %v3043
    %v3045 = vand.u32 %v3044, 4294901760
    %3046 = vmatpush1.msra.mxu0 %v3045
    %v3047 = vand.u32 %v148, 4294901760
    %v3048 = vsub.f32 %v148, %v3047
    %v3049 = vand.u32 %v3048, 4294901760
    %3050 = vmatprep.subr.mxu0 %v3049
    %v3051 = vand.u32 %v147, 4294901760
    %v3052 = vsub.f32 %v147, %v3051
    %v3053 = vand.u32 %v3052, 4294901760
    %3054 = vmatpush1.msra.mxu0 %v3053
    %3055 = vmatprep.subr.mxu0 0.0
    %3056 = vmatpush1.msra.mxu0 0.0
    %3057 = vmatprep.subr.mxu0 0.0
    %3058 = vmatpush1.msra.mxu0 0.0
    %3059 = vmatprep.subr.mxu0 0.0
    %3060 = vmatpush1.msra.mxu0 0.0
    %3061 = vmatprep.subr.mxu0 0.0
    %3062 = vmatpush1.msra.mxu0 0.0
    %3063 = vmatprep.subr.mxu0 0.0
    %3064 = vmatpush1.msra.mxu0 0.0
    %3065 = vmatprep.subr.mxu0 0.0
    %3066 = vmatpush1.msra.mxu0 0.0
    %3067 = vmatprep.subr.mxu0 0.0
    %3068 = vmatpush1.msra.mxu0 0.0
    %3069 = vmatprep.subr.mxu0 0.0
    %3070 = vmatpush1.msra.mxu0 0.0
    %3071 = vmatprep.subr.mxu0 0.0
    %3072 = vmatpush1.msra.mxu0 0.0
    %3073 = vmatprep.subr.mxu0 0.0
    %3074 = vmatpush1.msra.mxu0 0.0
    %3075 = vmatprep.subr.mxu0 0.0
    %3076 = vmatpush1.msra.mxu0 0.0
    %3077 = vmatprep.subr.mxu0 0.0
    %3078 = vmatpush1.msra.mxu0 0.0
    %3079 = vmatprep.subr.mxu0 0.0
    %3080 = vmatpush1.msra.mxu0 0.0
    %3081 = vmatprep.subr.mxu0 0.0
    %3082 = vmatpush1.msra.mxu0 0.0
    %3083 = vmatprep.subr.mxu0 0.0
    %3084 = vmatpush1.msra.mxu0 0.0
    %3085 = vmatprep.subr.mxu0 0.0
    %3086 = vmatpush1.msra.mxu0 0.0
    %3087 = vmatprep.subr.mxu0 0.0
    %3088 = vmatpush1.msra.mxu0 0.0
    %3089 = vmatprep.subr.mxu0 0.0
    %3090 = vmatpush1.msra.mxu0 0.0
    %3091 = vmatprep.subr.mxu0 0.0
    %3092 = vmatpush1.msra.mxu0 0.0
    %3093 = vmatprep.subr.mxu0 0.0
    %3094 = vmatpush1.msra.mxu0 0.0
    %3095 = vmatprep.mubr.f32.mxu0 0.0
    %v3096 = vand.u32 %v193, 4294901760
    %3097 = vmatmul.mubr.f32.gmra.mrb[0].mxu0 %v3096
    %v3098 = vpop.f32.mrb[0].mxu0
    %v3099 = vadd.f32 %v2955, %v3098
    %v3100 = vpop.f32.mrb[0].mxu0
    %v3101 = vadd.f32 %v2957, %v3100
    %3102 = vdwg.mxu0
    %v3103 = vand.u32 %v60, 4294901760
    %3104 = vmatprep.subr.mxu0 %v3103
    %v3105 = vand.u32 %v59, 4294901760
    %3106 = vmatpush1.msra.mxu0 %v3105
    %v3107 = vand.u32 %v68, 4294901760
    %3108 = vmatprep.subr.mxu0 %v3107
    %v3109 = vand.u32 %v67, 4294901760
    %3110 = vmatpush1.msra.mxu0 %v3109
    %v3111 = vand.u32 %v76, 4294901760
    %3112 = vmatprep.subr.mxu0 %v3111
    %v3113 = vand.u32 %v75, 4294901760
    %3114 = vmatpush1.msra.mxu0 %v3113
    %v3115 = vand.u32 %v84, 4294901760
    %3116 = vmatprep.subr.mxu0 %v3115
    %v3117 = vand.u32 %v83, 4294901760
    %3118 = vmatpush1.msra.mxu0 %v3117
    %v3119 = vand.u32 %v92, 4294901760
    %3120 = vmatprep.subr.mxu0 %v3119
    %v3121 = vand.u32 %v91, 4294901760
    %3122 = vmatpush1.msra.mxu0 %v3121
    %v3123 = vand.u32 %v100, 4294901760
    %3124 = vmatprep.subr.mxu0 %v3123
    %v3125 = vand.u32 %v99, 4294901760
    %3126 = vmatpush1.msra.mxu0 %v3125
    %v3127 = vand.u32 %v108, 4294901760
    %3128 = vmatprep.subr.mxu0 %v3127
    %v3129 = vand.u32 %v107, 4294901760
    %3130 = vmatpush1.msra.mxu0 %v3129
    %v3131 = vand.u32 %v116, 4294901760
    %3132 = vmatprep.subr.mxu0 %v3131
    %v3133 = vand.u32 %v115, 4294901760
    %3134 = vmatpush1.msra.mxu0 %v3133
    %v3135 = vand.u32 %v124, 4294901760
    %3136 = vmatprep.subr.mxu0 %v3135
    %v3137 = vand.u32 %v123, 4294901760
    %3138 = vmatpush1.msra.mxu0 %v3137
    %v3139 = vand.u32 %v132, 4294901760
    %3140 = vmatprep.subr.mxu0 %v3139
    %v3141 = vand.u32 %v131, 4294901760
    %3142 = vmatpush1.msra.mxu0 %v3141
    %v3143 = vand.u32 %v140, 4294901760
    %3144 = vmatprep.subr.mxu0 %v3143
    %v3145 = vand.u32 %v139, 4294901760
    %3146 = vmatpush1.msra.mxu0 %v3145
    %v3147 = vand.u32 %v148, 4294901760
    %3148 = vmatprep.subr.mxu0 %v3147
    %v3149 = vand.u32 %v147, 4294901760
    %3150 = vmatpush1.msra.mxu0 %v3149
    %3151 = vmatprep.subr.mxu0 0.0
    %3152 = vmatpush1.msra.mxu0 0.0
    %3153 = vmatprep.subr.mxu0 0.0
    %3154 = vmatpush1.msra.mxu0 0.0
    %3155 = vmatprep.subr.mxu0 0.0
    %3156 = vmatpush1.msra.mxu0 0.0
    %3157 = vmatprep.subr.mxu0 0.0
    %3158 = vmatpush1.msra.mxu0 0.0
    %3159 = vmatprep.subr.mxu0 0.0
    %3160 = vmatpush1.msra.mxu0 0.0
    %3161 = vmatprep.subr.mxu0 0.0
    %3162 = vmatpush1.msra.mxu0 0.0
    %3163 = vmatprep.subr.mxu0 0.0
    %3164 = vmatpush1.msra.mxu0 0.0
    %3165 = vmatprep.subr.mxu0 0.0
    %3166 = vmatpush1.msra.mxu0 0.0
    %3167 = vmatprep.subr.mxu0 0.0
    %3168 = vmatpush1.msra.mxu0 0.0
    %3169 = vmatprep.subr.mxu0 0.0
    %3170 = vmatpush1.msra.mxu0 0.0
    %3171 = vmatprep.subr.mxu0 0.0
    %3172 = vmatpush1.msra.mxu0 0.0
    %3173 = vmatprep.subr.mxu0 0.0
    %3174 = vmatpush1.msra.mxu0 0.0
    %3175 = vmatprep.subr.mxu0 0.0
    %3176 = vmatpush1.msra.mxu0 0.0
    %3177 = vmatprep.subr.mxu0 0.0
    %3178 = vmatpush1.msra.mxu0 0.0
    %3179 = vmatprep.subr.mxu0 0.0
    %3180 = vmatpush1.msra.mxu0 0.0
    %3181 = vmatprep.subr.mxu0 0.0
    %3182 = vmatpush1.msra.mxu0 0.0
    %3183 = vmatprep.subr.mxu0 0.0
    %3184 = vmatpush1.msra.mxu0 0.0
    %3185 = vmatprep.subr.mxu0 0.0
    %3186 = vmatpush1.msra.mxu0 0.0
    %3187 = vmatprep.subr.mxu0 0.0
    %3188 = vmatpush1.msra.mxu0 0.0
    %3189 = vmatprep.subr.mxu0 0.0
    %3190 = vmatpush1.msra.mxu0 0.0
    %3191 = vmatprep.mubr.f32.mxu0 0.0
    %v3192 = vand.u32 %v193, 4294901760
    %3193 = vmatmul.mubr.f32.gmra.mrb[0].mxu0 %v3192
    %v3194 = vpop.f32.mrb[0].mxu0
    %v3195 = vadd.f32 %v3099, %v3194
    %v3196 = vpop.f32.mrb[0].mxu0
    %v3197 = vadd.f32 %v3101, %v3196
    %3198 = vdwg.mxu0
    %3199 = vst [vmem:[#allocation8] sm:$0xff] %v942
    %3200 = vst [vmem:[#allocation8 + $0x8] sm:$0xff] %v944
    %3201 = vst [vmem:[#allocation8 + $0x10] sm:$0xff] %v1693
    %3202 = vst [vmem:[#allocation8 + $0x18] sm:$0xff] %v1695
    %3203 = vst [vmem:[#allocation8 + $0x20] sm:$0xff] %v2444
    %3204 = vst [vmem:[#allocation8 + $0x28] sm:$0xff] %v2446
    %3205 = vst [vmem:[#allocation8 + $0x30] sm:$0xff] %v3195
    %3206 = vst [vmem:[#allocation8 + $0x38] sm:$0xff] %v3197
    // Predicated region
    $region26: #{tpu_custom_call.1} parent=1 // pred_check
      _
    $region27: #{tpu_custom_call.1} parent=1 // pred_check_branch
      %3208 = sbr.rel (0) target = $region29
    $region28: #{tpu_custom_call.1} parent=1 // pred_region
      %s3210 = ssub.s32 1024, 1024
      %3211 = vsyncadd [#allocation4], %s3210
      %s3213 = sshll.u32 [#allocation8], 4
      %s3214 = int_to_ptr.vmem [resolvable:$true] %s3213
      %3216 = dma.vmem_to_hbm [thread:$0]  %s3214, 1024, %s3, [#allocation4]
    $region29: #{tpu_custom_call.1} parent=1 // pred_fallthru
      _
    // Predicated region
    $region30: #{tpu_custom_call.1} parent=1 // pred_check
      _
    $region31: #{tpu_custom_call.1} parent=1 // pred_check_branch
      %3218 = sbr.rel (0) target = $region33
    $region32: #{tpu_custom_call.1} parent=1 // pred_region
      %3219 = dma.done [#allocation4], 1024
    $region33: #{tpu_custom_call.1} parent=1 // pred_fallthru
      _
    %3220 = vsyncpa [#allocation3], 1
    %3221 = vsyncpa [#allocation6], 1
    %3222 = vsyncpa [#allocation4], 1

</llo_original>
